<compile_context>
chip_gen: v7x
topology: tpu7x:2x2x1
jax: 0.10.0
libtpu: 0.0.40
codegen_flags: <defaults>
</compile_context>

<pallas_src>
import functools

import jax
import jax.numpy as jnp
from jax.experimental import pallas as pl
from jax.experimental.pallas import tpu as pltpu

CP = 128     # lane width for activations / packed conv K
NCP = 128    # padded class count (lane-dense classifier output)


# ------------------------------ fused kernel ------------------------------- #

def _fused_forward_kernel(x_ref, w1_ref, b1_ref, w2_ref, b2_ref, wc_ref, bc_ref,
                          o_ref, c1_ref, pad_ref, *, bb, H, W, C1, C2):
    """bb samples: conv+ReLU+pool -> conv+ReLU+pool -> linear; 3 matmuls total."""
    H1, W1 = H // 2, W // 2
    H2, W2 = H1 // 2, W1 // 2
    f32 = jnp.float32
    cdt = w1_ref.dtype                                        # bf16 or f32 operands
    lane = jax.lax.broadcasted_iota(jnp.int32, (1, 1, 1, CP), 3)

    # ---- conv1: ONE MXU contraction (input im2col-packed: lane = tap*cin + ci).
    # w1 output columns are replicated over the 9 conv2 tap groups so the conv1
    # activation lands pre-positioned at lane k*C1 + c for the conv2 K-packing.
    a1 = jnp.dot(x_ref[...], w1_ref[...], preferred_element_type=f32)
    a1 = jnp.maximum(a1 + b1_ref[...], 0.0)                   # (bb*H*W, CP) f32
    c1_ref[...] = a1

    # ---- 2x2 max-pool #1, fully vectorized ------------------------------------
    r1 = bb * H * W1
    ew = jnp.maximum(c1_ref[pl.ds(0, r1, stride=2), :],       # x-even vs x-odd
                     c1_ref[pl.ds(1, r1, stride=2), :])
    ew = ew.reshape(bb * H1, 2 * W1, CP)                      # rows (b,i); sub (y-par, x)
    p1 = jnp.maximum(ew[:, :W1, :], ew[:, W1:, :])            # y-even vs y-odd
    pad_ref[...] = jnp.zeros_like(pad_ref)                    # halo border = 0 each step
    pad_ref[:, 1:H1 + 1, 1:W1 + 1, :] = p1.reshape(bb, H1, W1, CP)

    # ---- build conv2's K-packed operand: lane group k <- tap-(dy,dx) window ----
    pk = jnp.zeros((bb, H1, W1, CP), f32)
    for k in range(9):
        dy, dx = divmod(k, 3)
        sel = (lane >= k * C1) & (lane < (k + 1) * C1)
        pk = jnp.where(sel, pad_ref[:, dy:dy + H1, dx:dx + W1, :], pk)

    # ---- conv2: ONE MXU contraction (K = 9*C1 packed lanes).  w2 output columns
    # are replicated over the H2*W2 spatial slots for the classifier packing. ----
    a2 = jnp.dot(pk.reshape(bb * H1 * W1, CP).astype(cdt), w2_ref[...],
                 preferred_element_type=f32)
    a2 = jnp.maximum(a2 + b2_ref[...], 0.0)                   # (bb*H1*W1, CP) f32

    # ---- 2x2 max-pool #2 fused with the lane-dense feature pack: each lane keeps
    # only the rows of its own pooling window (masked max; ReLU output >= 0). ----
    nslot = H2 * W2
    g = jnp.zeros((1, 1, 1, CP), jnp.int32)                   # lane -> spatial slot id
    for t in range(1, nslot):
        g = g + (lane >= t * C2).astype(jnp.int32)
    ii = jax.lax.broadcasted_iota(jnp.int32, (1, H1, 1, 1), 1)
    jj = jax.lax.broadcasted_iota(jnp.int32, (1, 1, W1, 1), 2)
    i2 = jnp.zeros((1, H1, 1, 1), jnp.int32)                  # i // 2, division-free
    for t in range(1, H2):
        i2 = i2 + (ii >= 2 * t).astype(jnp.int32)
    j2 = jnp.zeros((1, 1, W1, 1), jnp.int32)                  # j // 2, division-free
    for t in range(1, W2):
        j2 = j2 + (jj >= 2 * t).astype(jnp.int32)
    sel2 = g == (i2 * W2 + j2)                                # (1, H1, W1, CP)
    a2 = a2.reshape(bb, H1, W1, CP)
    feat = jnp.where(sel2, a2, 0.0).max(axis=2).max(axis=1)   # (bb, CP)

    # ---- classifier: ONE (bb, CP) x (CP, NCP) matmul; lane-dense 128-wide store -
    scores = jnp.dot(feat.astype(cdt), wc_ref[...],
                     preferred_element_type=f32) + bc_ref[...]
    o_ref[0] = scores


# ------------------------------ pallas wrapper ------------------------------ #

def _fused_pallas_forward(xk, params, *, H, W, bb, c1, c2):
    """xk: (Npad*H*W, CP) im2col/K-packed conv1 input (compute dtype)."""
    rows = xk.shape[0]
    steps = rows // (bb * H * W)
    H1, W1 = H // 2, W // 2
    kernel = functools.partial(_fused_forward_kernel, bb=bb, H=H, W=W, C1=c1, C2=c2)
    out = pl.pallas_call(
        kernel,
        out_shape=jax.ShapeDtypeStruct((steps, bb, NCP), jnp.float32),
        grid=(steps,),                                         # one batch block / step
        in_specs=[
            pl.BlockSpec((bb * H * W, CP), lambda n: (n, 0)),  # packed conv1 input
            pl.BlockSpec((CP, CP), lambda n: (0, 0)),          # w1 (VMEM resident)
            pl.BlockSpec((1, CP), lambda n: (0, 0)),           # b1
            pl.BlockSpec((CP, CP), lambda n: (0, 0)),          # w2 (VMEM resident)
            pl.BlockSpec((1, CP), lambda n: (0, 0)),           # b2
            pl.BlockSpec((CP, NCP), lambda n: (0, 0)),         # wc (resident, 64 KiB)
            pl.BlockSpec((1, NCP), lambda n: (0, 0)),          # bc
        ],
        out_specs=pl.BlockSpec((1, bb, NCP), lambda n: (n, 0, 0)),
        scratch_shapes=[
            pltpu.VMEM((bb * H * W, CP), jnp.float32),          # conv1 output
            pltpu.VMEM((bb, H1 + 2, W1 + 2, CP), jnp.float32),  # pooled map, halo-padded
        ],
        compiler_params=pltpu.CompilerParams(
            dimension_semantics=("parallel",),    # v7x megacore: shard batch blocks
            vmem_limit_bytes=32 * 1024 * 1024,
        ),
    )(xk, params["w1"], params["b1"], params["w2"], params["b2"],
      params["wc"], params["bc"])
    return out.reshape(steps * bb, NCP)


# ----------------------- parameter prep (outside jit) ----------------------- #

def prepare_params(conv_blocks, cls_w, cls_b, *, feat_c, feat_h, feat_w,
                   compute_dtype=jnp.bfloat16):
    """Pack/permutate weights once.
      conv1: rows = im2col K (tap*cin + ci); cols replicated over the 9 conv2-tap
             lane groups (col = k*c1 + co).
      conv2: rows = packed K (k*c1 + ci); cols replicated over feat_h*feat_w
             spatial slots (col = s*c2 + co).
      classifier: row s*c2 + c  <->  PyTorch NCHW-flatten index c*(H2*W2) + s."""
    assert len(conv_blocks) == 2, "fused kernel is specialized for 2 conv blocks"
    (w1, b1), (w2, b2) = conv_blocks
    c0 = w1.shape[1]
    c1 = w1.shape[0]
    c2 = w2.shape[0]
    assert w2.shape[1] == c1 and feat_c == c2
    nslot = feat_h * feat_w
    num_class = cls_w.shape[0]
    assert 9 * c0 <= CP and 9 * c1 <= CP and nslot * c2 <= CP and num_class <= NCP
    f32 = jnp.float32

    core1 = jnp.transpose(w1.astype(f32), (2, 3, 1, 0)).reshape(9 * c0, c1)
    w1p = jnp.zeros((CP, CP), f32).at[:9 * c0, :9 * c1].set(jnp.tile(core1, (1, 9)))
    b1p = jnp.zeros((1, CP), f32).at[0, :9 * c1].set(jnp.tile(b1.astype(f32), 9))

    core2 = jnp.transpose(w2.astype(f32), (2, 3, 1, 0)).reshape(9 * c1, c2)
    w2p = jnp.zeros((CP, CP), f32).at[:9 * c1, :nslot * c2].set(
        jnp.tile(core2, (1, nslot)))
    b2p = jnp.zeros((1, CP), f32).at[0, :nslot * c2].set(
        jnp.tile(b2.astype(f32), nslot))

    wr = jnp.transpose(cls_w.astype(f32).reshape(num_class, c2, nslot), (2, 1, 0))
    wcp = jnp.zeros((CP, NCP), f32).at[:nslot * c2, :num_class].set(
        wr.reshape(nslot * c2, num_class))
    bcp = jnp.zeros((1, NCP), f32).at[0, :num_class].set(cls_b.astype(f32))

    return {"w1": w1p.astype(compute_dtype), "b1": b1p,
            "w2": w2p.astype(compute_dtype), "b2": b2p,
            "wc": wcp.astype(compute_dtype), "bc": bcp}


@functools.partial(jax.jit, static_argnames=("num_class", "c1", "c2", "b_blk"))
def baseline_train_forward(x, params, *, num_class, c1, c2, b_blk=4):
    """BaselineTrain.forward: scores = classifier(feature(x)).  x is NCHW."""
    N, cin, H, W = x.shape
    assert H % 4 == 0 and W % 16 == 0, "kernel specialization: H%4==0, W%16==0"
    assert 9 * cin <= CP
    cdt = params["w1"].dtype

    # Pack conv1's input once on the XLA side: im2col over the 3x3 taps into a
    # single 128-lane K (9*cin real lanes) -> conv1 is ONE matmul in-kernel.
    xh = jnp.transpose(x, (0, 2, 3, 1))                          # NHWC
    xp = jnp.pad(xh, ((0, 0), (1, 1), (1, 1), (0, 0)))
    taps = [xp[:, dy:dy + H, dx:dx + W, :] for dy in range(3) for dx in range(3)]
    xk = jnp.concatenate(taps, axis=-1)                          # (N, H, W, 9*cin)
    xk = jnp.pad(xk, ((0, 0), (0, 0), (0, 0), (0, CP - 9 * cin))).astype(cdt)

    bb = max(1, min(b_blk, N))
    npad = ((N + bb - 1) // bb) * bb
    if npad != N:
        xk = jnp.pad(xk, ((0, npad - N), (0, 0), (0, 0), (0, 0)))
    xk = xk.reshape(npad * H * W, CP)

    scores = _fused_pallas_forward(xk, params, H=H, W=W, bb=bb, c1=c1, c2=c2)
    return scores[:N, :num_class]


# ----------------------------- reference (JAX) ------------------------------ #

def _reference_forward(x, conv_blocks, cls_w, cls_b):
    h = x
    for (w, b) in conv_blocks:
        h = jax.lax.conv_general_dilated(
            h, w, window_strides=(1, 1), padding="SAME",
            dimension_numbers=("NCHW", "OIHW", "NCHW"))
        h = jnp.maximum(h + b.reshape(1, -1, 1, 1), 0.0)
        h = jax.lax.reduce_window(
            h, -jnp.inf, jax.lax.max, (1, 1, 2, 2), (1, 1, 2, 2), "VALID")
    feat = h.reshape(h.shape[0], -1)
    return feat @ cls_w.T + cls_b


# ---------------------------------- main ------------------------------------ #

if __name__ == "__main__":
    key = jax.random.PRNGKey(0)
    k_x, k_w1, k_b1, k_w2, k_b2, k_wc = jax.random.split(key, 6)

    batch, in_ch, spatial = 2, 3, 16
    hidden_ch, num_class = 8, 5

    # Input, PyTorch NCHW convention.
    x = jax.random.normal(k_x, (batch, in_ch, spatial, spatial), dtype=jnp.float32)

    # Deterministic synthetic parameters (no checkpoint loading).
    conv_blocks = [
        (0.1 * jax.random.normal(k_w1, (hidden_ch, in_ch, 3, 3), dtype=jnp.float32),
         0.1 * jax.random.normal(k_b1, (hidden_ch,), dtype=jnp.float32)),
        (0.1 * jax.random.normal(k_w2, (hidden_ch, hidden_ch, 3, 3), dtype=jnp.float32),
         0.1 * jax.random.normal(k_b2, (hidden_ch,), dtype=jnp.float32)),
    ]
    feat_h = feat_w = spatial // 4
    final_feat_dim = hidden_ch * feat_h * feat_w                 # 8*4*4 = 128
    cls_w = 0.1 * jax.random.normal(k_wc, (num_class, final_feat_dim), dtype=jnp.float32)
    cls_b = jnp.zeros((num_class,), dtype=jnp.float32)           # bias.data.fill_(0)

    ref = _reference_forward(x, conv_blocks, cls_w, cls_b)

    # f32 operands: exact check against the reference.
    params32 = prepare_params(conv_blocks, cls_w, cls_b, feat_c=hidden_ch,
                              feat_h=feat_h, feat_w=feat_w,
                              compute_dtype=jnp.float32)
    s32 = baseline_train_forward(x, params32, num_class=num_class,
                                 c1=hidden_ch, c2=hidden_ch)
    s32 = jax.block_until_ready(s32)
    assert s32.shape == (batch, num_class)
    assert jnp.allclose(s32, ref, atol=1e-4, rtol=1e-4), "f32 mismatch vs reference"

    # bf16 operands with f32 accumulation: the fast path on v6e/v7x.
    params16 = prepare_params(conv_blocks, cls_w, cls_b, feat_c=hidden_ch,
                              feat_h=feat_h, feat_w=feat_w,
                              compute_dtype=jnp.bfloat16)
    s16 = baseline_train_forward(x, params16, num_class=num_class,
                                 c1=hidden_ch, c2=hidden_ch)
    s16 = jax.block_until_ready(s16)
    assert jnp.allclose(s16, ref, atol=5e-2, rtol=5e-2), "bf16 mismatch vs reference"

    print("KERNEL_OK")
</pallas_src>

<mosaic_0001>
module attributes {stable_mosaic.version = 11 : i64} {
  func.func @_fused_forward_kernel(%arg0: i32, %arg1: memref<512x128xf32, #tpu.memory_space<vmem>>, %arg2: memref<128x128xf32, #tpu.memory_space<vmem>>, %arg3: memref<1x128xf32, #tpu.memory_space<vmem>>, %arg4: memref<128x128xf32, #tpu.memory_space<vmem>>, %arg5: memref<1x128xf32, #tpu.memory_space<vmem>>, %arg6: memref<128x128xf32, #tpu.memory_space<vmem>>, %arg7: memref<1x128xf32, #tpu.memory_space<vmem>>, %arg8: memref<1x2x128xf32, #tpu.memory_space<vmem>>, %arg9: memref<512x128xf32, #tpu.memory_space<vmem>>, %arg10: memref<2x10x10x128xf32, #tpu.memory_space<vmem>>) attributes {dimension_semantics = [#tpu.dimension_semantics<parallel>], iteration_bounds = array<i64: 1>, scalar_prefetch = 0 : i64, scratch_operands = 2 : i64, tpu.core_type = #tpu.core_type<tc>, window_params = [{transform_indices = @transform_0, window_bounds = array<i64: 512, 128>}, {pipeline_mode = #tpu.pipeline_mode<synchronous>, transform_indices = @transform_1, window_bounds = array<i64: 128, 128>}, {pipeline_mode = #tpu.pipeline_mode<synchronous>, transform_indices = @transform_2, window_bounds = array<i64: 1, 128>}, {pipeline_mode = #tpu.pipeline_mode<synchronous>, transform_indices = @transform_3, window_bounds = array<i64: 128, 128>}, {pipeline_mode = #tpu.pipeline_mode<synchronous>, transform_indices = @transform_4, window_bounds = array<i64: 1, 128>}, {pipeline_mode = #tpu.pipeline_mode<synchronous>, transform_indices = @transform_5, window_bounds = array<i64: 128, 128>}, {pipeline_mode = #tpu.pipeline_mode<synchronous>, transform_indices = @transform_6, window_bounds = array<i64: 1, 128>}, {transform_indices = @transform_7, window_bounds = array<i64: 1, 2, 128>}]} {
    %0 = tpu.iota {dimensions = array<i32: 3>} : vector<1x1x1x128xi32>
    %c0 = arith.constant 0 : index
    %c0_0 = arith.constant 0 : index
    %1 = vector.load %arg1[%c0, %c0_0] : memref<512x128xf32, #tpu.memory_space<vmem>>, vector<512x128xf32>
    %c0_1 = arith.constant 0 : index
    %c0_2 = arith.constant 0 : index
    %2 = vector.load %arg2[%c0_1, %c0_2] : memref<128x128xf32, #tpu.memory_space<vmem>>, vector<128x128xf32>
    %cst = arith.constant dense<0.000000e+00> : vector<512x128xf32>
    %3 = tpu.matmul %1, %2, %cst {dimension_numbers = #tpu.dot_dimension_numbers<[1], [0], [0], [1], [0, 0, 1, 1], [], []>} : vector<512x128xf32>, vector<128x128xf32>, vector<512x128xf32> -> vector<512x128xf32>
    %c0_3 = arith.constant 0 : index
    %c0_4 = arith.constant 0 : index
    %4 = vector.load %arg3[%c0_3, %c0_4] : memref<1x128xf32, #tpu.memory_space<vmem>>, vector<1x128xf32>
    %5 = vector.broadcast %4 : vector<1x128xf32> to vector<512x128xf32>
    %6 = arith.addf %3, %5 : vector<512x128xf32>
    %cst_5 = arith.constant 0.000000e+00 : f32
    %7 = vector.broadcast %cst_5 : f32 to vector<512x128xf32>
    %8 = arith.maximumf %6, %7 : vector<512x128xf32>
    %c0_6 = arith.constant 0 : index
    %c0_7 = arith.constant 0 : index
    %9 = vector.load %arg9[%c0_6, %c0_7] : memref<512x128xf32, #tpu.memory_space<vmem>>, vector<512x128xf32>
    tpu.vector_store %arg9[%c0_6, %c0_7], %8 {strides = array<i32>} : memref<512x128xf32, #tpu.memory_space<vmem>>, vector<512x128xf32>,
    %c0_8 = arith.constant 0 : index
    %c0_9 = arith.constant 0 : index
    %10 = tpu.strided_load %arg9[%c0_8, %c0_9] {strides = array<i32: 2, 1>} : memref<512x128xf32, #tpu.memory_space<vmem>>, vector<256x128xf32>
    %c1 = arith.constant 1 : index
    %c0_10 = arith.constant 0 : index
    %11 = tpu.strided_load %arg9[%c1, %c0_10] {strides = array<i32: 2, 1>} : memref<512x128xf32, #tpu.memory_space<vmem>>, vector<256x128xf32>
    %12 = arith.maximumf %10, %11 : vector<256x128xf32>
    %13 = vector.shape_cast %12 : vector<256x128xf32> to vector<16x16x128xf32>
    %14 = vector.extract_strided_slice %13 {offsets = [0, 0, 0], sizes = [16, 8, 128], strides = [1, 1, 1]} : vector<16x16x128xf32> to vector<16x8x128xf32>
    %15 = vector.extract_strided_slice %13 {offsets = [0, 8, 0], sizes = [16, 8, 128], strides = [1, 1, 1]} : vector<16x16x128xf32> to vector<16x8x128xf32>
    %16 = arith.maximumf %14, %15 : vector<16x8x128xf32>
    %cst_11 = arith.constant 0.000000e+00 : f32
    %17 = vector.broadcast %cst_11 : f32 to vector<2x10x10x128xf32>
    %c0_12 = arith.constant 0 : index
    %c0_13 = arith.constant 0 : index
    %c0_14 = arith.constant 0 : index
    %c0_15 = arith.constant 0 : index
    %18 = vector.load %arg10[%c0_12, %c0_13, %c0_14, %c0_15] : memref<2x10x10x128xf32, #tpu.memory_space<vmem>>, vector<2x10x10x128xf32>
    tpu.vector_store %arg10[%c0_12, %c0_13, %c0_14, %c0_15], %17 {strides = array<i32>} : memref<2x10x10x128xf32, #tpu.memory_space<vmem>>, vector<2x10x10x128xf32>,
    %19 = vector.shape_cast %16 : vector<16x8x128xf32> to vector<2x8x8x128xf32>
    %c0_16 = arith.constant 0 : index
    %c1_17 = arith.constant 1 : index
    %c1_18 = arith.constant 1 : index
    %c0_19 = arith.constant 0 : index
    %20 = vector.load %arg10[%c0_16, %c1_17, %c1_18, %c0_19] : memref<2x10x10x128xf32, #tpu.memory_space<vmem>>, vector<2x8x8x128xf32>
    tpu.vector_store %arg10[%c0_16, %c1_17, %c1_18, %c0_19], %19 {strides = array<i32>} : memref<2x10x10x128xf32, #tpu.memory_space<vmem>>, vector<2x8x8x128xf32>,
    %cst_20 = arith.constant 0.000000e+00 : f32
    %21 = vector.broadcast %cst_20 : f32 to vector<2x8x8x128xf32>
    %c0_i32 = arith.constant 0 : i32
    %22 = vector.broadcast %c0_i32 : i32 to vector<1x1x1x128xi32>
    %23 = arith.cmpi sge, %0, %22 : vector<1x1x1x128xi32>
    %c8_i32 = arith.constant 8 : i32
    %24 = vector.broadcast %c8_i32 : i32 to vector<1x1x1x128xi32>
    %25 = arith.cmpi slt, %0, %24 : vector<1x1x1x128xi32>
    %26 = arith.andi %23, %25 : vector<1x1x1x128xi1>
    %c0_21 = arith.constant 0 : index
    %c0_22 = arith.constant 0 : index
    %c0_23 = arith.constant 0 : index
    %c0_24 = arith.constant 0 : index
    %27 = vector.load %arg10[%c0_21, %c0_22, %c0_23, %c0_24] : memref<2x10x10x128xf32, #tpu.memory_space<vmem>>, vector<2x8x8x128xf32>
    %28 = vector.shape_cast %26 : vector<1x1x1x128xi1> to vector<1x1x1x128xi1>
    %29 = vector.broadcast %28 : vector<1x1x1x128xi1> to vector<2x8x8x128xi1>
    %30 = arith.select %29, %27, %21 : vector<2x8x8x128xi1>, vector<2x8x8x128xf32>
    %c8_i32_25 = arith.constant 8 : i32
    %31 = vector.broadcast %c8_i32_25 : i32 to vector<1x1x1x128xi32>
    %32 = arith.cmpi sge, %0, %31 : vector<1x1x1x128xi32>
    %c16_i32 = arith.constant 16 : i32
    %33 = vector.broadcast %c16_i32 : i32 to vector<1x1x1x128xi32>
    %34 = arith.cmpi slt, %0, %33 : vector<1x1x1x128xi32>
    %35 = arith.andi %32, %34 : vector<1x1x1x128xi1>
    %c0_26 = arith.constant 0 : index
    %c0_27 = arith.constant 0 : index
    %c1_28 = arith.constant 1 : index
    %c0_29 = arith.constant 0 : index
    %36 = vector.load %arg10[%c0_26, %c0_27, %c1_28, %c0_29] : memref<2x10x10x128xf32, #tpu.memory_space<vmem>>, vector<2x8x8x128xf32>
    %37 = vector.shape_cast %35 : vector<1x1x1x128xi1> to vector<1x1x1x128xi1>
    %38 = vector.broadcast %37 : vector<1x1x1x128xi1> to vector<2x8x8x128xi1>
    %39 = arith.select %38, %36, %30 : vector<2x8x8x128xi1>, vector<2x8x8x128xf32>
    %c16_i32_30 = arith.constant 16 : i32
    %40 = vector.broadcast %c16_i32_30 : i32 to vector<1x1x1x128xi32>
    %41 = arith.cmpi sge, %0, %40 : vector<1x1x1x128xi32>
    %c24_i32 = arith.constant 24 : i32
    %42 = vector.broadcast %c24_i32 : i32 to vector<1x1x1x128xi32>
    %43 = arith.cmpi slt, %0, %42 : vector<1x1x1x128xi32>
    %44 = arith.andi %41, %43 : vector<1x1x1x128xi1>
    %c0_31 = arith.constant 0 : index
    %c0_32 = arith.constant 0 : index
    %c2 = arith.constant 2 : index
    %c0_33 = arith.constant 0 : index
    %45 = vector.load %arg10[%c0_31, %c0_32, %c2, %c0_33] : memref<2x10x10x128xf32, #tpu.memory_space<vmem>>, vector<2x8x8x128xf32>
    %46 = vector.shape_cast %44 : vector<1x1x1x128xi1> to vector<1x1x1x128xi1>
    %47 = vector.broadcast %46 : vector<1x1x1x128xi1> to vector<2x8x8x128xi1>
    %48 = arith.select %47, %45, %39 : vector<2x8x8x128xi1>, vector<2x8x8x128xf32>
    %c24_i32_34 = arith.constant 24 : i32
    %49 = vector.broadcast %c24_i32_34 : i32 to vector<1x1x1x128xi32>
    %50 = arith.cmpi sge, %0, %49 : vector<1x1x1x128xi32>
    %c32_i32 = arith.constant 32 : i32
    %51 = vector.broadcast %c32_i32 : i32 to vector<1x1x1x128xi32>
    %52 = arith.cmpi slt, %0, %51 : vector<1x1x1x128xi32>
    %53 = arith.andi %50, %52 : vector<1x1x1x128xi1>
    %c0_35 = arith.constant 0 : index
    %c1_36 = arith.constant 1 : index
    %c0_37 = arith.constant 0 : index
    %c0_38 = arith.constant 0 : index
    %54 = vector.load %arg10[%c0_35, %c1_36, %c0_37, %c0_38] : memref<2x10x10x128xf32, #tpu.memory_space<vmem>>, vector<2x8x8x128xf32>
    %55 = vector.shape_cast %53 : vector<1x1x1x128xi1> to vector<1x1x1x128xi1>
    %56 = vector.broadcast %55 : vector<1x1x1x128xi1> to vector<2x8x8x128xi1>
    %57 = arith.select %56, %54, %48 : vector<2x8x8x128xi1>, vector<2x8x8x128xf32>
    %c32_i32_39 = arith.constant 32 : i32
    %58 = vector.broadcast %c32_i32_39 : i32 to vector<1x1x1x128xi32>
    %59 = arith.cmpi sge, %0, %58 : vector<1x1x1x128xi32>
    %c40_i32 = arith.constant 40 : i32
    %60 = vector.broadcast %c40_i32 : i32 to vector<1x1x1x128xi32>
    %61 = arith.cmpi slt, %0, %60 : vector<1x1x1x128xi32>
    %62 = arith.andi %59, %61 : vector<1x1x1x128xi1>
    %c0_40 = arith.constant 0 : index
    %c1_41 = arith.constant 1 : index
    %c1_42 = arith.constant 1 : index
    %c0_43 = arith.constant 0 : index
    %63 = vector.load %arg10[%c0_40, %c1_41, %c1_42, %c0_43] : memref<2x10x10x128xf32, #tpu.memory_space<vmem>>, vector<2x8x8x128xf32>
    %64 = vector.shape_cast %62 : vector<1x1x1x128xi1> to vector<1x1x1x128xi1>
    %65 = vector.broadcast %64 : vector<1x1x1x128xi1> to vector<2x8x8x128xi1>
    %66 = arith.select %65, %63, %57 : vector<2x8x8x128xi1>, vector<2x8x8x128xf32>
    %c40_i32_44 = arith.constant 40 : i32
    %67 = vector.broadcast %c40_i32_44 : i32 to vector<1x1x1x128xi32>
    %68 = arith.cmpi sge, %0, %67 : vector<1x1x1x128xi32>
    %c48_i32 = arith.constant 48 : i32
    %69 = vector.broadcast %c48_i32 : i32 to vector<1x1x1x128xi32>
    %70 = arith.cmpi slt, %0, %69 : vector<1x1x1x128xi32>
    %71 = arith.andi %68, %70 : vector<1x1x1x128xi1>
    %c0_45 = arith.constant 0 : index
    %c1_46 = arith.constant 1 : index
    %c2_47 = arith.constant 2 : index
    %c0_48 = arith.constant 0 : index
    %72 = vector.load %arg10[%c0_45, %c1_46, %c2_47, %c0_48] : memref<2x10x10x128xf32, #tpu.memory_space<vmem>>, vector<2x8x8x128xf32>
    %73 = vector.shape_cast %71 : vector<1x1x1x128xi1> to vector<1x1x1x128xi1>
    %74 = vector.broadcast %73 : vector<1x1x1x128xi1> to vector<2x8x8x128xi1>
    %75 = arith.select %74, %72, %66 : vector<2x8x8x128xi1>, vector<2x8x8x128xf32>
    %c48_i32_49 = arith.constant 48 : i32
    %76 = vector.broadcast %c48_i32_49 : i32 to vector<1x1x1x128xi32>
    %77 = arith.cmpi sge, %0, %76 : vector<1x1x1x128xi32>
    %c56_i32 = arith.constant 56 : i32
    %78 = vector.broadcast %c56_i32 : i32 to vector<1x1x1x128xi32>
    %79 = arith.cmpi slt, %0, %78 : vector<1x1x1x128xi32>
    %80 = arith.andi %77, %79 : vector<1x1x1x128xi1>
    %c0_50 = arith.constant 0 : index
    %c2_51 = arith.constant 2 : index
    %c0_52 = arith.constant 0 : index
    %c0_53 = arith.constant 0 : index
    %81 = vector.load %arg10[%c0_50, %c2_51, %c0_52, %c0_53] : memref<2x10x10x128xf32, #tpu.memory_space<vmem>>, vector<2x8x8x128xf32>
    %82 = vector.shape_cast %80 : vector<1x1x1x128xi1> to vector<1x1x1x128xi1>
    %83 = vector.broadcast %82 : vector<1x1x1x128xi1> to vector<2x8x8x128xi1>
    %84 = arith.select %83, %81, %75 : vector<2x8x8x128xi1>, vector<2x8x8x128xf32>
    %c56_i32_54 = arith.constant 56 : i32
    %85 = vector.broadcast %c56_i32_54 : i32 to vector<1x1x1x128xi32>
    %86 = arith.cmpi sge, %0, %85 : vector<1x1x1x128xi32>
    %c64_i32 = arith.constant 64 : i32
    %87 = vector.broadcast %c64_i32 : i32 to vector<1x1x1x128xi32>
    %88 = arith.cmpi slt, %0, %87 : vector<1x1x1x128xi32>
    %89 = arith.andi %86, %88 : vector<1x1x1x128xi1>
    %c0_55 = arith.constant 0 : index
    %c2_56 = arith.constant 2 : index
    %c1_57 = arith.constant 1 : index
    %c0_58 = arith.constant 0 : index
    %90 = vector.load %arg10[%c0_55, %c2_56, %c1_57, %c0_58] : memref<2x10x10x128xf32, #tpu.memory_space<vmem>>, vector<2x8x8x128xf32>
    %91 = vector.shape_cast %89 : vector<1x1x1x128xi1> to vector<1x1x1x128xi1>
    %92 = vector.broadcast %91 : vector<1x1x1x128xi1> to vector<2x8x8x128xi1>
    %93 = arith.select %92, %90, %84 : vector<2x8x8x128xi1>, vector<2x8x8x128xf32>
    %c64_i32_59 = arith.constant 64 : i32
    %94 = vector.broadcast %c64_i32_59 : i32 to vector<1x1x1x128xi32>
    %95 = arith.cmpi sge, %0, %94 : vector<1x1x1x128xi32>
    %c72_i32 = arith.constant 72 : i32
    %96 = vector.broadcast %c72_i32 : i32 to vector<1x1x1x128xi32>
    %97 = arith.cmpi slt, %0, %96 : vector<1x1x1x128xi32>
    %98 = arith.andi %95, %97 : vector<1x1x1x128xi1>
    %c0_60 = arith.constant 0 : index
    %c2_61 = arith.constant 2 : index
    %c2_62 = arith.constant 2 : index
    %c0_63 = arith.constant 0 : index
    %99 = vector.load %arg10[%c0_60, %c2_61, %c2_62, %c0_63] : memref<2x10x10x128xf32, #tpu.memory_space<vmem>>, vector<2x8x8x128xf32>
    %100 = vector.shape_cast %98 : vector<1x1x1x128xi1> to vector<1x1x1x128xi1>
    %101 = vector.broadcast %100 : vector<1x1x1x128xi1> to vector<2x8x8x128xi1>
    %102 = arith.select %101, %99, %93 : vector<2x8x8x128xi1>, vector<2x8x8x128xf32>
    %103 = vector.shape_cast %102 : vector<2x8x8x128xf32> to vector<128x128xf32>
    %c0_64 = arith.constant 0 : index
    %c0_65 = arith.constant 0 : index
    %104 = vector.load %arg4[%c0_64, %c0_65] : memref<128x128xf32, #tpu.memory_space<vmem>>, vector<128x128xf32>
    %cst_66 = arith.constant dense<0.000000e+00> : vector<128x128xf32>
    %105 = tpu.matmul %103, %104, %cst_66 {dimension_numbers = #tpu.dot_dimension_numbers<[1], [0], [0], [1], [0, 0, 1, 1], [], []>} : vector<128x128xf32>, vector<128x128xf32>, vector<128x128xf32> -> vector<128x128xf32>
    %c0_67 = arith.constant 0 : index
    %c0_68 = arith.constant 0 : index
    %106 = vector.load %arg5[%c0_67, %c0_68] : memref<1x128xf32, #tpu.memory_space<vmem>>, vector<1x128xf32>
    %107 = vector.broadcast %106 : vector<1x128xf32> to vector<128x128xf32>
    %108 = arith.addf %105, %107 : vector<128x128xf32>
    %cst_69 = arith.constant 0.000000e+00 : f32
    %109 = vector.broadcast %cst_69 : f32 to vector<128x128xf32>
    %110 = arith.maximumf %108, %109 : vector<128x128xf32>
    %c0_i32_70 = arith.constant 0 : i32
    %111 = vector.broadcast %c0_i32_70 : i32 to vector<1x1x1x128xi32>
    %c8_i32_71 = arith.constant 8 : i32
    %112 = vector.broadcast %c8_i32_71 : i32 to vector<1x1x1x128xi32>
    %113 = arith.cmpi sge, %0, %112 : vector<1x1x1x128xi32>
    %114 = arith.extui %113 : vector<1x1x1x128xi1> to vector<1x1x1x128xi32>
    %115 = arith.addi %111, %114 : vector<1x1x1x128xi32>
    %c16_i32_72 = arith.constant 16 : i32
    %116 = vector.broadcast %c16_i32_72 : i32 to vector<1x1x1x128xi32>
    %117 = arith.cmpi sge, %0, %116 : vector<1x1x1x128xi32>
    %118 = arith.extui %117 : vector<1x1x1x128xi1> to vector<1x1x1x128xi32>
    %119 = arith.addi %115, %118 : vector<1x1x1x128xi32>
    %c24_i32_73 = arith.constant 24 : i32
    %120 = vector.broadcast %c24_i32_73 : i32 to vector<1x1x1x128xi32>
    %121 = arith.cmpi sge, %0, %120 : vector<1x1x1x128xi32>
    %122 = arith.extui %121 : vector<1x1x1x128xi1> to vector<1x1x1x128xi32>
    %123 = arith.addi %119, %122 : vector<1x1x1x128xi32>
    %c32_i32_74 = arith.constant 32 : i32
    %124 = vector.broadcast %c32_i32_74 : i32 to vector<1x1x1x128xi32>
    %125 = arith.cmpi sge, %0, %124 : vector<1x1x1x128xi32>
    %126 = arith.extui %125 : vector<1x1x1x128xi1> to vector<1x1x1x128xi32>
    %127 = arith.addi %123, %126 : vector<1x1x1x128xi32>
    %c40_i32_75 = arith.constant 40 : i32
    %128 = vector.broadcast %c40_i32_75 : i32 to vector<1x1x1x128xi32>
    %129 = arith.cmpi sge, %0, %128 : vector<1x1x1x128xi32>
    %130 = arith.extui %129 : vector<1x1x1x128xi1> to vector<1x1x1x128xi32>
    %131 = arith.addi %127, %130 : vector<1x1x1x128xi32>
    %c48_i32_76 = arith.constant 48 : i32
    %132 = vector.broadcast %c48_i32_76 : i32 to vector<1x1x1x128xi32>
    %133 = arith.cmpi sge, %0, %132 : vector<1x1x1x128xi32>
    %134 = arith.extui %133 : vector<1x1x1x128xi1> to vector<1x1x1x128xi32>
    %135 = arith.addi %131, %134 : vector<1x1x1x128xi32>
    %c56_i32_77 = arith.constant 56 : i32
    %136 = vector.broadcast %c56_i32_77 : i32 to vector<1x1x1x128xi32>
    %137 = arith.cmpi sge, %0, %136 : vector<1x1x1x128xi32>
    %138 = arith.extui %137 : vector<1x1x1x128xi1> to vector<1x1x1x128xi32>
    %139 = arith.addi %135, %138 : vector<1x1x1x128xi32>
    %c64_i32_78 = arith.constant 64 : i32
    %140 = vector.broadcast %c64_i32_78 : i32 to vector<1x1x1x128xi32>
    %141 = arith.cmpi sge, %0, %140 : vector<1x1x1x128xi32>
    %142 = arith.extui %141 : vector<1x1x1x128xi1> to vector<1x1x1x128xi32>
    %143 = arith.addi %139, %142 : vector<1x1x1x128xi32>
    %c72_i32_79 = arith.constant 72 : i32
    %144 = vector.broadcast %c72_i32_79 : i32 to vector<1x1x1x128xi32>
    %145 = arith.cmpi sge, %0, %144 : vector<1x1x1x128xi32>
    %146 = arith.extui %145 : vector<1x1x1x128xi1> to vector<1x1x1x128xi32>
    %147 = arith.addi %143, %146 : vector<1x1x1x128xi32>
    %c80_i32 = arith.constant 80 : i32
    %148 = vector.broadcast %c80_i32 : i32 to vector<1x1x1x128xi32>
    %149 = arith.cmpi sge, %0, %148 : vector<1x1x1x128xi32>
    %150 = arith.extui %149 : vector<1x1x1x128xi1> to vector<1x1x1x128xi32>
    %151 = arith.addi %147, %150 : vector<1x1x1x128xi32>
    %c88_i32 = arith.constant 88 : i32
    %152 = vector.broadcast %c88_i32 : i32 to vector<1x1x1x128xi32>
    %153 = arith.cmpi sge, %0, %152 : vector<1x1x1x128xi32>
    %154 = arith.extui %153 : vector<1x1x1x128xi1> to vector<1x1x1x128xi32>
    %155 = arith.addi %151, %154 : vector<1x1x1x128xi32>
    %c96_i32 = arith.constant 96 : i32
    %156 = vector.broadcast %c96_i32 : i32 to vector<1x1x1x128xi32>
    %157 = arith.cmpi sge, %0, %156 : vector<1x1x1x128xi32>
    %158 = arith.extui %157 : vector<1x1x1x128xi1> to vector<1x1x1x128xi32>
    %159 = arith.addi %155, %158 : vector<1x1x1x128xi32>
    %c104_i32 = arith.constant 104 : i32
    %160 = vector.broadcast %c104_i32 : i32 to vector<1x1x1x128xi32>
    %161 = arith.cmpi sge, %0, %160 : vector<1x1x1x128xi32>
    %162 = arith.extui %161 : vector<1x1x1x128xi1> to vector<1x1x1x128xi32>
    %163 = arith.addi %159, %162 : vector<1x1x1x128xi32>
    %c112_i32 = arith.constant 112 : i32
    %164 = vector.broadcast %c112_i32 : i32 to vector<1x1x1x128xi32>
    %165 = arith.cmpi sge, %0, %164 : vector<1x1x1x128xi32>
    %166 = arith.extui %165 : vector<1x1x1x128xi1> to vector<1x1x1x128xi32>
    %167 = arith.addi %163, %166 : vector<1x1x1x128xi32>
    %c120_i32 = arith.constant 120 : i32
    %168 = vector.broadcast %c120_i32 : i32 to vector<1x1x1x128xi32>
    %169 = arith.cmpi sge, %0, %168 : vector<1x1x1x128xi32>
    %170 = arith.extui %169 : vector<1x1x1x128xi1> to vector<1x1x1x128xi32>
    %171 = arith.addi %167, %170 : vector<1x1x1x128xi32>
    %172 = tpu.iota {dimensions = array<i32: 1>} : vector<1x8x1x1xi32>
    %173 = tpu.iota {dimensions = array<i32: 2>} : vector<1x1x8x1xi32>
    %c0_i32_80 = arith.constant 0 : i32
    %174 = vector.broadcast %c0_i32_80 : i32 to vector<1x8x1x1xi32>
    %c2_i32 = arith.constant 2 : i32
    %175 = vector.broadcast %c2_i32 : i32 to vector<1x8x1x1xi32>
    %176 = arith.cmpi sge, %172, %175 : vector<1x8x1x1xi32>
    %177 = arith.extui %176 : vector<1x8x1x1xi1> to vector<1x8x1x1xi32>
    %178 = arith.addi %174, %177 : vector<1x8x1x1xi32>
    %c4_i32 = arith.constant 4 : i32
    %179 = vector.broadcast %c4_i32 : i32 to vector<1x8x1x1xi32>
    %180 = arith.cmpi sge, %172, %179 : vector<1x8x1x1xi32>
    %181 = arith.extui %180 : vector<1x8x1x1xi1> to vector<1x8x1x1xi32>
    %182 = arith.addi %178, %181 : vector<1x8x1x1xi32>
    %c6_i32 = arith.constant 6 : i32
    %183 = vector.broadcast %c6_i32 : i32 to vector<1x8x1x1xi32>
    %184 = arith.cmpi sge, %172, %183 : vector<1x8x1x1xi32>
    %185 = arith.extui %184 : vector<1x8x1x1xi1> to vector<1x8x1x1xi32>
    %186 = arith.addi %182, %185 : vector<1x8x1x1xi32>
    %c0_i32_81 = arith.constant 0 : i32
    %187 = vector.broadcast %c0_i32_81 : i32 to vector<1x1x8x1xi32>
    %c2_i32_82 = arith.constant 2 : i32
    %188 = vector.broadcast %c2_i32_82 : i32 to vector<1x1x8x1xi32>
    %189 = arith.cmpi sge, %173, %188 : vector<1x1x8x1xi32>
    %190 = arith.extui %189 : vector<1x1x8x1xi1> to vector<1x1x8x1xi32>
    %191 = arith.addi %187, %190 : vector<1x1x8x1xi32>
    %c4_i32_83 = arith.constant 4 : i32
    %192 = vector.broadcast %c4_i32_83 : i32 to vector<1x1x8x1xi32>
    %193 = arith.cmpi sge, %173, %192 : vector<1x1x8x1xi32>
    %194 = arith.extui %193 : vector<1x1x8x1xi1> to vector<1x1x8x1xi32>
    %195 = arith.addi %191, %194 : vector<1x1x8x1xi32>
    %c6_i32_84 = arith.constant 6 : i32
    %196 = vector.broadcast %c6_i32_84 : i32 to vector<1x1x8x1xi32>
    %197 = arith.cmpi sge, %173, %196 : vector<1x1x8x1xi32>
    %198 = arith.extui %197 : vector<1x1x8x1xi1> to vector<1x1x8x1xi32>
    %199 = arith.addi %195, %198 : vector<1x1x8x1xi32>
    %c4_i32_85 = arith.constant 4 : i32
    %200 = vector.broadcast %c4_i32_85 : i32 to vector<1x8x1x1xi32>
    %201 = arith.muli %186, %200 : vector<1x8x1x1xi32>
    %202 = vector.broadcast %201 : vector<1x8x1x1xi32> to vector<1x8x8x1xi32>
    %203 = vector.broadcast %199 : vector<1x1x8x1xi32> to vector<1x8x8x1xi32>
    %204 = arith.addi %202, %203 : vector<1x8x8x1xi32>
    %205 = vector.broadcast %171 : vector<1x1x1x128xi32> to vector<1x8x8x128xi32>
    %206 = vector.broadcast %204 : vector<1x8x8x1xi32> to vector<1x8x8x128xi32>
    %207 = arith.cmpi eq, %205, %206 : vector<1x8x8x128xi32>
    %208 = vector.shape_cast %110 : vector<128x128xf32> to vector<2x8x8x128xf32>
    %cst_86 = arith.constant 0.000000e+00 : f32
    %209 = vector.shape_cast %207 : vector<1x8x8x128xi1> to vector<1x8x8x128xi1>
    %210 = vector.broadcast %209 : vector<1x8x8x128xi1> to vector<2x8x8x128xi1>
    %211 = vector.broadcast %cst_86 : f32 to vector<2x8x8x128xf32>
    %212 = arith.select %210, %208, %211 : vector<2x8x8x128xi1>, vector<2x8x8x128xf32>
    %cst_87 = arith.constant dense<0xFF800000> : vector<2x8x128xf32>
    %213 = vector.multi_reduction <maximumf>, %212, %cst_87 [2] : vector<2x8x8x128xf32> to vector<2x8x128xf32>
    %cst_88 = arith.constant dense<0xFF800000> : vector<2x128xf32>
    %214 = vector.multi_reduction <maximumf>, %213, %cst_88 [1] : vector<2x8x128xf32> to vector<2x128xf32>
    %c0_89 = arith.constant 0 : index
    %c0_90 = arith.constant 0 : index
    %215 = vector.load %arg6[%c0_89, %c0_90] : memref<128x128xf32, #tpu.memory_space<vmem>>, vector<128x128xf32>
    %cst_91 = arith.constant dense<0.000000e+00> : vector<2x128xf32>
    %216 = tpu.matmul %214, %215, %cst_91 {dimension_numbers = #tpu.dot_dimension_numbers<[1], [0], [0], [1], [0, 0, 1, 1], [], []>} : vector<2x128xf32>, vector<128x128xf32>, vector<2x128xf32> -> vector<2x128xf32>
    %c0_92 = arith.constant 0 : index
    %c0_93 = arith.constant 0 : index
    %217 = vector.load %arg7[%c0_92, %c0_93] : memref<1x128xf32, #tpu.memory_space<vmem>>, vector<1x128xf32>
    %218 = vector.broadcast %217 : vector<1x128xf32> to vector<2x128xf32>
    %219 = arith.addf %216, %218 : vector<2x128xf32>
    %c0_94 = arith.constant 0 : index
    %c0_95 = arith.constant 0 : index
    %c0_96 = arith.constant 0 : index
    %220 = vector.load %arg8[%c0_94, %c0_95, %c0_96] : memref<1x2x128xf32, #tpu.memory_space<vmem>>, vector<1x2x128xf32>
    %221 = vector.shape_cast %220 : vector<1x2x128xf32> to vector<2x128xf32>
    %222 = vector.shape_cast %219 : vector<2x128xf32> to vector<1x2x128xf32>
    tpu.vector_store %arg8[%c0_94, %c0_95, %c0_96], %222 {strides = array<i32>} : memref<1x2x128xf32, #tpu.memory_space<vmem>>, vector<1x2x128xf32>,
    return
  }
  func.func @transform_0(%arg0: i32) -> (i32, i32) {
    %c0_i32 = arith.constant 0 : i32
    %c0_i32_0 = arith.constant 0 : i32
    return %arg0, %c0_i32 : i32, i32
  }
  func.func @transform_1(%arg0: i32) -> (i32, i32) {
    %c0_i32 = arith.constant 0 : i32
    %c0_i32_0 = arith.constant 0 : i32
    %c0_i32_1 = arith.constant 0 : i32
    return %c0_i32, %c0_i32_0 : i32, i32
  }
  func.func @transform_2(%arg0: i32) -> (i32, i32) {
    %c0_i32 = arith.constant 0 : i32
    %c0_i32_0 = arith.constant 0 : i32
    %c0_i32_1 = arith.constant 0 : i32
    return %c0_i32, %c0_i32_0 : i32, i32
  }
  func.func @transform_3(%arg0: i32) -> (i32, i32) {
    %c0_i32 = arith.constant 0 : i32
    %c0_i32_0 = arith.constant 0 : i32
    %c0_i32_1 = arith.constant 0 : i32
    return %c0_i32, %c0_i32_0 : i32, i32
  }
  func.func @transform_4(%arg0: i32) -> (i32, i32) {
    %c0_i32 = arith.constant 0 : i32
    %c0_i32_0 = arith.constant 0 : i32
    %c0_i32_1 = arith.constant 0 : i32
    return %c0_i32, %c0_i32_0 : i32, i32
  }
  func.func @transform_5(%arg0: i32) -> (i32, i32) {
    %c0_i32 = arith.constant 0 : i32
    %c0_i32_0 = arith.constant 0 : i32
    %c0_i32_1 = arith.constant 0 : i32
    return %c0_i32, %c0_i32_0 : i32, i32
  }
  func.func @transform_6(%arg0: i32) -> (i32, i32) {
    %c0_i32 = arith.constant 0 : i32
    %c0_i32_0 = arith.constant 0 : i32
    %c0_i32_1 = arith.constant 0 : i32
    return %c0_i32, %c0_i32_0 : i32, i32
  }
  func.func @transform_7(%arg0: i32) -> (i32, i32, i32) {
    %c0_i32 = arith.constant 0 : i32
    %c0_i32_0 = arith.constant 0 : i32
    %c0_i32_1 = arith.constant 0 : i32
    return %arg0, %c0_i32, %c0_i32_0 : i32, i32, i32
  }
}

</mosaic_0001>

<llo_original>
// kernel: baseline_train_forward.1
$region0: #{baseline_train_forward.1}
  #allocation0 [shape = 'u32[]', space=smem, size = 0x4, offset = 0x4, fixed_abs, tag = 'smem constant byte address 0x4 - core index']
  #allocation1 [shape = 'u32[144,128]{1,0:T(1,128)}', space=vmem, size = 0x12000, scoped, tag = 'internal scratch']
  #allocation2 [shape = 'f32[512,128]{1,0:T(8,128)}', space=vmem, size = 0x40000, scoped, tag = 'scratch operand']
  #allocation3 [shape = 'f32[2,10,10,128]{3,2,1,0:T(8,128)}', space=vmem, size = 0x28000, scoped, tag = 'scratch operand']
  %s0 = inlined_call_operand.vmem [shape: f32[512,128], index: 0, kind: input, shape index: {}]
  %s1 = inlined_call_operand.vmem [shape: f32[128,128], index: 1, kind: input, shape index: {}]
  %s2 = inlined_call_operand.vmem [shape: f32[1,128], index: 2, kind: input, shape index: {}]
  %s3 = inlined_call_operand.vmem [shape: f32[128,128], index: 3, kind: input, shape index: {}]
  %s4 = inlined_call_operand.vmem [shape: f32[1,128], index: 4, kind: input, shape index: {}]
  %s5 = inlined_call_operand.vmem [shape: f32[128,128], index: 5, kind: input, shape index: {}]
  %s6 = inlined_call_operand.vmem [shape: f32[1,128], index: 6, kind: input, shape index: {}]
  %s7 = inlined_call_operand.hbm [shape: f32[1,2,128], index: 7, kind: output, shape index: {}]
  %s8 = sld [smem:[#allocation0]]
  $region38: #{baseline_train_forward.1} parent=0
    _
  %s10 = ssub.s32 1, %s8
  %s11 = scalar_select 0, %s10, %s8
  $region1: #{baseline_train_forward.1} parent=0
    #allocation4 [shape = 'u8[1024]{0}', space=vmem, size = 0x400, scoped, tag = 'output window, operand 0, single buffered']
    #allocation5 [shape = 's32[1]{0}', space=sflag, size = 0x4, scoped, tag = 'scoped memory for baseline_train_forward.1']
    %12 = vsyncpa [#allocation5], 0
    // Predicated region
    $region2: #{baseline_train_forward.1} parent=1 // pred_check
      _
    $region3: #{baseline_train_forward.1} parent=1 // pred_check_branch
      %14 = sbr.rel (0) target = $region5
    $region4: #{baseline_train_forward.1} parent=1 // pred_region
      _
    $region5: #{baseline_train_forward.1} parent=1 // pred_fallthru
      _
    // Predicated region
    $region6: #{baseline_train_forward.1} parent=1 // pred_check
      _
    $region7: #{baseline_train_forward.1} parent=1 // pred_check_branch
      %16 = sbr.rel (0) target = $region9
    $region8: #{baseline_train_forward.1} parent=1 // pred_region
      _
    $region9: #{baseline_train_forward.1} parent=1 // pred_fallthru
      _
    // Predicated region
    $region10: #{baseline_train_forward.1} parent=1 // pred_check
      _
    $region11: #{baseline_train_forward.1} parent=1 // pred_check_branch
      %18 = sbr.rel (0) target = $region13
    $region12: #{baseline_train_forward.1} parent=1 // pred_region
      _
    $region13: #{baseline_train_forward.1} parent=1 // pred_fallthru
      _
    // Predicated region
    $region14: #{baseline_train_forward.1} parent=1 // pred_check
      _
    $region15: #{baseline_train_forward.1} parent=1 // pred_check_branch
      %20 = sbr.rel (0) target = $region17
    $region16: #{baseline_train_forward.1} parent=1 // pred_region
      _
    $region17: #{baseline_train_forward.1} parent=1 // pred_fallthru
      _
    // Predicated region
    $region18: #{baseline_train_forward.1} parent=1 // pred_check
      _
    $region19: #{baseline_train_forward.1} parent=1 // pred_check_branch
      %22 = sbr.rel (0) target = $region21
    $region20: #{baseline_train_forward.1} parent=1 // pred_region
      _
    $region21: #{baseline_train_forward.1} parent=1 // pred_fallthru
      _
    // Predicated region
    $region22: #{baseline_train_forward.1} parent=1 // pred_check
      _
    $region23: #{baseline_train_forward.1} parent=1 // pred_check_branch
      %24 = sbr.rel (0) target = $region25
    $region24: #{baseline_train_forward.1} parent=1 // pred_region
      _
    $region25: #{baseline_train_forward.1} parent=1 // pred_fallthru
      _
    // Predicated region
    $region26: #{baseline_train_forward.1} parent=1 // pred_check
      _
    $region27: #{baseline_train_forward.1} parent=1 // pred_check_branch
      %26 = sbr.rel (0) target = $region29
    $region28: #{baseline_train_forward.1} parent=1 // pred_region
      _
    $region29: #{baseline_train_forward.1} parent=1 // pred_fallthru
      _
    %v27 = vlaneseq
    %v28 = vand.u32 %v27, 127
    %v29 = vld [vmem:[%s0] sm:$0xff]
    %v30 = vld [vmem:[%s0 + $0x8] sm:$0xff]
    %v31 = vld [vmem:[%s0 + $0x10] sm:$0xff]
    %v32 = vld [vmem:[%s0 + $0x18] sm:$0xff]
    %v33 = vld [vmem:[%s0 + $0x20] sm:$0xff]
    %v34 = vld [vmem:[%s0 + $0x28] sm:$0xff]
    %v35 = vld [vmem:[%s0 + $0x30] sm:$0xff]
    %v36 = vld [vmem:[%s0 + $0x38] sm:$0xff]
    %v37 = vld [vmem:[%s0 + $0x40] sm:$0xff]
    %v38 = vld [vmem:[%s0 + $0x48] sm:$0xff]
    %v39 = vld [vmem:[%s0 + $0x50] sm:$0xff]
    %v40 = vld [vmem:[%s0 + $0x58] sm:$0xff]
    %v41 = vld [vmem:[%s0 + $0x60] sm:$0xff]
    %v42 = vld [vmem:[%s0 + $0x68] sm:$0xff]
    %v43 = vld [vmem:[%s0 + $0x70] sm:$0xff]
    %v44 = vld [vmem:[%s0 + $0x78] sm:$0xff]
    %v45 = vld [vmem:[%s0 + $0x80] sm:$0xff]
    %v46 = vld [vmem:[%s0 + $0x88] sm:$0xff]
    %v47 = vld [vmem:[%s0 + $0x90] sm:$0xff]
    %v48 = vld [vmem:[%s0 + $0x98] sm:$0xff]
    %v49 = vld [vmem:[%s0 + $0xa0] sm:$0xff]
    %v50 = vld [vmem:[%s0 + $0xa8] sm:$0xff]
    %v51 = vld [vmem:[%s0 + $0xb0] sm:$0xff]
    %v52 = vld [vmem:[%s0 + $0xb8] sm:$0xff]
    %v53 = vld [vmem:[%s0 + $0xc0] sm:$0xff]
    %v54 = vld [vmem:[%s0 + $0xc8] sm:$0xff]
    %v55 = vld [vmem:[%s0 + $0xd0] sm:$0xff]
    %v56 = vld [vmem:[%s0 + $0xd8] sm:$0xff]
    %v57 = vld [vmem:[%s0 + $0xe0] sm:$0xff]
    %v58 = vld [vmem:[%s0 + $0xe8] sm:$0xff]
    %v59 = vld [vmem:[%s0 + $0xf0] sm:$0xff]
    %v60 = vld [vmem:[%s0 + $0xf8] sm:$0xff]
    %v61 = vld [vmem:[%s0 + $0x100] sm:$0xff]
    %v62 = vld [vmem:[%s0 + $0x108] sm:$0xff]
    %v63 = vld [vmem:[%s0 + $0x110] sm:$0xff]
    %v64 = vld [vmem:[%s0 + $0x118] sm:$0xff]
    %v65 = vld [vmem:[%s0 + $0x120] sm:$0xff]
    %v66 = vld [vmem:[%s0 + $0x128] sm:$0xff]
    %v67 = vld [vmem:[%s0 + $0x130] sm:$0xff]
    %v68 = vld [vmem:[%s0 + $0x138] sm:$0xff]
    %v69 = vld [vmem:[%s0 + $0x140] sm:$0xff]
    %v70 = vld [vmem:[%s0 + $0x148] sm:$0xff]
    %v71 = vld [vmem:[%s0 + $0x150] sm:$0xff]
    %v72 = vld [vmem:[%s0 + $0x158] sm:$0xff]
    %v73 = vld [vmem:[%s0 + $0x160] sm:$0xff]
    %v74 = vld [vmem:[%s0 + $0x168] sm:$0xff]
    %v75 = vld [vmem:[%s0 + $0x170] sm:$0xff]
    %v76 = vld [vmem:[%s0 + $0x178] sm:$0xff]
    %v77 = vld [vmem:[%s0 + $0x180] sm:$0xff]
    %v78 = vld [vmem:[%s0 + $0x188] sm:$0xff]
    %v79 = vld [vmem:[%s0 + $0x190] sm:$0xff]
    %v80 = vld [vmem:[%s0 + $0x198] sm:$0xff]
    %v81 = vld [vmem:[%s0 + $0x1a0] sm:$0xff]
    %v82 = vld [vmem:[%s0 + $0x1a8] sm:$0xff]
    %v83 = vld [vmem:[%s0 + $0x1b0] sm:$0xff]
    %v84 = vld [vmem:[%s0 + $0x1b8] sm:$0xff]
    %v85 = vld [vmem:[%s0 + $0x1c0] sm:$0xff]
    %v86 = vld [vmem:[%s0 + $0x1c8] sm:$0xff]
    %v87 = vld [vmem:[%s0 + $0x1d0] sm:$0xff]
    %v88 = vld [vmem:[%s0 + $0x1d8] sm:$0xff]
    %v89 = vld [vmem:[%s0 + $0x1e0] sm:$0xff]
    %v90 = vld [vmem:[%s0 + $0x1e8] sm:$0xff]
    %v91 = vld [vmem:[%s0 + $0x1f0] sm:$0xff]
    %v92 = vld [vmem:[%s0 + $0x1f8] sm:$0xff]
    %v93 = vld [vmem:[%s1] sm:$0xff]
    %v94 = vld [vmem:[%s1 + $0x8] sm:$0xff]
    %v95 = vld [vmem:[%s1 + $0x10] sm:$0xff]
    %v96 = vld [vmem:[%s1 + $0x18] sm:$0xff]
    %v97 = vld [vmem:[%s1 + $0x20] sm:$0xff]
    %v98 = vld [vmem:[%s1 + $0x28] sm:$0xff]
    %v99 = vld [vmem:[%s1 + $0x30] sm:$0xff]
    %v100 = vld [vmem:[%s1 + $0x38] sm:$0xff]
    %v101 = vld [vmem:[%s1 + $0x40] sm:$0xff]
    %v102 = vld [vmem:[%s1 + $0x48] sm:$0xff]
    %v103 = vld [vmem:[%s1 + $0x50] sm:$0xff]
    %v104 = vld [vmem:[%s1 + $0x58] sm:$0xff]
    %v105 = vld [vmem:[%s1 + $0x60] sm:$0xff]
    %v106 = vld [vmem:[%s1 + $0x68] sm:$0xff]
    %v107 = vld [vmem:[%s1 + $0x70] sm:$0xff]
    %v108 = vld [vmem:[%s1 + $0x78] sm:$0xff]
    %v109 = vld [vmem:[%s2] sm:$0x1]
    %v111 = vlaneseq
    %v112 = vshrl.u32 %v111, 7
    %v113 = vsub.s32 0, %v112
    %v114 = vrot.slane %v109, %v113
    %116 = vmatprep.subr.mxu0 0.0
    %117 = vmatpush1.msra.mxu0 %v93
    %118 = vmatprep.subr.mxu0 0.0
    %119 = vmatpush1.msra.mxu0 %v94
    %120 = vmatprep.subr.mxu0 0.0
    %121 = vmatpush1.msra.mxu0 %v95
    %122 = vmatprep.subr.mxu0 0.0
    %123 = vmatpush1.msra.mxu0 %v96
    %124 = vmatprep.subr.mxu0 0.0
    %125 = vmatpush1.msra.mxu0 %v97
    %126 = vmatprep.subr.mxu0 0.0
    %127 = vmatpush1.msra.mxu0 %v98
    %128 = vmatprep.subr.mxu0 0.0
    %129 = vmatpush1.msra.mxu0 %v99
    %130 = vmatprep.subr.mxu0 0.0
    %131 = vmatpush1.msra.mxu0 %v100
    %132 = vmatprep.subr.mxu0 0.0
    %133 = vmatpush1.msra.mxu0 %v101
    %134 = vmatprep.subr.mxu0 0.0
    %135 = vmatpush1.msra.mxu0 %v102
    %136 = vmatprep.subr.mxu0 0.0
    %137 = vmatpush1.msra.mxu0 %v103
    %138 = vmatprep.subr.mxu0 0.0
    %139 = vmatpush1.msra.mxu0 %v104
    %140 = vmatprep.subr.mxu0 0.0
    %141 = vmatpush1.msra.mxu0 %v105
    %142 = vmatprep.subr.mxu0 0.0
    %143 = vmatpush1.msra.mxu0 %v106
    %144 = vmatprep.subr.mxu0 0.0
    %145 = vmatpush1.msra.mxu0 %v107
    %146 = vmatprep.subr.mxu0 0.0
    %147 = vmatpush1.msra.mxu0 %v108
    %148 = vmatprep.subr.mxu0 0.0
    %149 = vmatpush1.msra.mxu0 0.0
    %150 = vmatprep.subr.mxu0 0.0
    %151 = vmatpush1.msra.mxu0 0.0
    %152 = vmatprep.subr.mxu0 0.0
    %153 = vmatpush1.msra.mxu0 0.0
    %154 = vmatprep.subr.mxu0 0.0
    %155 = vmatpush1.msra.mxu0 0.0
    %156 = vmatprep.subr.mxu0 0.0
    %157 = vmatpush1.msra.mxu0 0.0
    %158 = vmatprep.subr.mxu0 0.0
    %159 = vmatpush1.msra.mxu0 0.0
    %160 = vmatprep.subr.mxu0 0.0
    %161 = vmatpush1.msra.mxu0 0.0
    %162 = vmatprep.subr.mxu0 0.0
    %163 = vmatpush1.msra.mxu0 0.0
    %164 = vmatprep.subr.mxu0 0.0
    %165 = vmatpush1.msra.mxu0 0.0
    %166 = vmatprep.subr.mxu0 0.0
    %167 = vmatpush1.msra.mxu0 0.0
    %168 = vmatprep.subr.mxu0 0.0
    %169 = vmatpush1.msra.mxu0 0.0
    %170 = vmatprep.subr.mxu0 0.0
    %171 = vmatpush1.msra.mxu0 0.0
    %172 = vmatprep.subr.mxu0 0.0
    %173 = vmatpush1.msra.mxu0 0.0
    %174 = vmatprep.subr.mxu0 0.0
    %175 = vmatpush1.msra.mxu0 0.0
    %176 = vmatprep.subr.mxu0 0.0
    %177 = vmatpush1.msra.mxu0 0.0
    %178 = vmatprep.subr.mxu0 0.0
    %179 = vmatpush1.msra.mxu0 0.0
    %180 = vmatprep.mubr.f32.mxu0 0.0
    %181 = vmatmul.mubr.f32.gmra.mrb[0].mxu0 %v29
    %v182 = vpop.f32.mrb[0].mxu0
    %v183 = vadd.f32 %v114, %v182
    %v184 = vpop.f32.mrb[0].mxu0
    %185 = vmatprep.mubr.f32.mxu0 0.0
    %186 = vmatmul.mubr.f32.gmra.mrb[0].mxu0 %v30
    %v187 = vpop.f32.mrb[0].mxu0
    %v188 = vadd.f32 %v114, %v187
    %v189 = vpop.f32.mrb[0].mxu0
    %190 = vmatprep.mubr.f32.mxu0 0.0
    %191 = vmatmul.mubr.f32.gmra.mrb[0].mxu0 %v31
    %v192 = vpop.f32.mrb[0].mxu0
    %v193 = vadd.f32 %v114, %v192
    %v194 = vpop.f32.mrb[0].mxu0
    %195 = vmatprep.mubr.f32.mxu0 0.0
    %196 = vmatmul.mubr.f32.gmra.mrb[0].mxu0 %v32
    %v197 = vpop.f32.mrb[0].mxu0
    %v198 = vadd.f32 %v114, %v197
    %v199 = vpop.f32.mrb[0].mxu0
    %200 = vmatprep.mubr.f32.mxu0 0.0
    %201 = vmatmul.mubr.f32.gmra.mrb[0].mxu0 %v33
    %v202 = vpop.f32.mrb[0].mxu0
    %v203 = vadd.f32 %v114, %v202
    %v204 = vpop.f32.mrb[0].mxu0
    %205 = vmatprep.mubr.f32.mxu0 0.0
    %206 = vmatmul.mubr.f32.gmra.mrb[0].mxu0 %v34
    %v207 = vpop.f32.mrb[0].mxu0
    %v208 = vadd.f32 %v114, %v207
    %v209 = vpop.f32.mrb[0].mxu0
    %210 = vmatprep.mubr.f32.mxu0 0.0
    %211 = vmatmul.mubr.f32.gmra.mrb[0].mxu0 %v35
    %v212 = vpop.f32.mrb[0].mxu0
    %v213 = vadd.f32 %v114, %v212
    %v214 = vpop.f32.mrb[0].mxu0
    %215 = vmatprep.mubr.f32.mxu0 0.0
    %216 = vmatmul.mubr.f32.gmra.mrb[0].mxu0 %v36
    %v217 = vpop.f32.mrb[0].mxu0
    %v218 = vadd.f32 %v114, %v217
    %v219 = vpop.f32.mrb[0].mxu0
    %220 = vmatprep.mubr.f32.mxu0 0.0
    %221 = vmatmul.mubr.f32.gmra.mrb[0].mxu0 %v37
    %v222 = vpop.f32.mrb[0].mxu0
    %v223 = vadd.f32 %v114, %v222
    %v224 = vpop.f32.mrb[0].mxu0
    %225 = vmatprep.mubr.f32.mxu0 0.0
    %226 = vmatmul.mubr.f32.gmra.mrb[0].mxu0 %v38
    %v227 = vpop.f32.mrb[0].mxu0
    %v228 = vadd.f32 %v114, %v227
    %v229 = vpop.f32.mrb[0].mxu0
    %230 = vmatprep.mubr.f32.mxu0 0.0
    %231 = vmatmul.mubr.f32.gmra.mrb[0].mxu0 %v39
    %v232 = vpop.f32.mrb[0].mxu0
    %v233 = vadd.f32 %v114, %v232
    %v234 = vpop.f32.mrb[0].mxu0
    %235 = vmatprep.mubr.f32.mxu0 0.0
    %236 = vmatmul.mubr.f32.gmra.mrb[0].mxu0 %v40
    %v237 = vpop.f32.mrb[0].mxu0
    %v238 = vadd.f32 %v114, %v237
    %v239 = vpop.f32.mrb[0].mxu0
    %240 = vmatprep.mubr.f32.mxu0 0.0
    %241 = vmatmul.mubr.f32.gmra.mrb[0].mxu0 %v41
    %v242 = vpop.f32.mrb[0].mxu0
    %v243 = vadd.f32 %v114, %v242
    %v244 = vpop.f32.mrb[0].mxu0
    %245 = vmatprep.mubr.f32.mxu0 0.0
    %246 = vmatmul.mubr.f32.gmra.mrb[0].mxu0 %v42
    %v247 = vpop.f32.mrb[0].mxu0
    %v248 = vadd.f32 %v114, %v247
    %v249 = vpop.f32.mrb[0].mxu0
    %250 = vmatprep.mubr.f32.mxu0 0.0
    %251 = vmatmul.mubr.f32.gmra.mrb[0].mxu0 %v43
    %v252 = vpop.f32.mrb[0].mxu0
    %v253 = vadd.f32 %v114, %v252
    %v254 = vpop.f32.mrb[0].mxu0
    %255 = vmatprep.mubr.f32.mxu0 0.0
    %256 = vmatmul.mubr.f32.gmra.mrb[0].mxu0 %v44
    %v257 = vpop.f32.mrb[0].mxu0
    %v258 = vadd.f32 %v114, %v257
    %v259 = vpop.f32.mrb[0].mxu0
    %260 = vmatprep.mubr.f32.mxu0 0.0
    %261 = vmatmul.mubr.f32.gmra.mrb[0].mxu0 %v45
    %v262 = vpop.f32.mrb[0].mxu0
    %v263 = vadd.f32 %v114, %v262
    %v264 = vpop.f32.mrb[0].mxu0
    %265 = vmatprep.mubr.f32.mxu0 0.0
    %266 = vmatmul.mubr.f32.gmra.mrb[0].mxu0 %v46
    %v267 = vpop.f32.mrb[0].mxu0
    %v268 = vadd.f32 %v114, %v267
    %v269 = vpop.f32.mrb[0].mxu0
    %270 = vmatprep.mubr.f32.mxu0 0.0
    %271 = vmatmul.mubr.f32.gmra.mrb[0].mxu0 %v47
    %v272 = vpop.f32.mrb[0].mxu0
    %v273 = vadd.f32 %v114, %v272
    %v274 = vpop.f32.mrb[0].mxu0
    %275 = vmatprep.mubr.f32.mxu0 0.0
    %276 = vmatmul.mubr.f32.gmra.mrb[0].mxu0 %v48
    %v277 = vpop.f32.mrb[0].mxu0
    %v278 = vadd.f32 %v114, %v277
    %v279 = vpop.f32.mrb[0].mxu0
    %280 = vmatprep.mubr.f32.mxu0 0.0
    %281 = vmatmul.mubr.f32.gmra.mrb[0].mxu0 %v49
    %v282 = vpop.f32.mrb[0].mxu0
    %v283 = vadd.f32 %v114, %v282
    %v284 = vpop.f32.mrb[0].mxu0
    %285 = vmatprep.mubr.f32.mxu0 0.0
    %286 = vmatmul.mubr.f32.gmra.mrb[0].mxu0 %v50
    %v287 = vpop.f32.mrb[0].mxu0
    %v288 = vadd.f32 %v114, %v287
    %v289 = vpop.f32.mrb[0].mxu0
    %290 = vmatprep.mubr.f32.mxu0 0.0
    %291 = vmatmul.mubr.f32.gmra.mrb[0].mxu0 %v51
    %v292 = vpop.f32.mrb[0].mxu0
    %v293 = vadd.f32 %v114, %v292
    %v294 = vpop.f32.mrb[0].mxu0
    %295 = vmatprep.mubr.f32.mxu0 0.0
    %296 = vmatmul.mubr.f32.gmra.mrb[0].mxu0 %v52
    %v297 = vpop.f32.mrb[0].mxu0
    %v298 = vadd.f32 %v114, %v297
    %v299 = vpop.f32.mrb[0].mxu0
    %300 = vmatprep.mubr.f32.mxu0 0.0
    %301 = vmatmul.mubr.f32.gmra.mrb[0].mxu0 %v53
    %v302 = vpop.f32.mrb[0].mxu0
    %v303 = vadd.f32 %v114, %v302
    %v304 = vpop.f32.mrb[0].mxu0
    %305 = vmatprep.mubr.f32.mxu0 0.0
    %306 = vmatmul.mubr.f32.gmra.mrb[0].mxu0 %v54
    %v307 = vpop.f32.mrb[0].mxu0
    %v308 = vadd.f32 %v114, %v307
    %v309 = vpop.f32.mrb[0].mxu0
    %310 = vmatprep.mubr.f32.mxu0 0.0
    %311 = vmatmul.mubr.f32.gmra.mrb[0].mxu0 %v55
    %v312 = vpop.f32.mrb[0].mxu0
    %v313 = vadd.f32 %v114, %v312
    %v314 = vpop.f32.mrb[0].mxu0
    %315 = vmatprep.mubr.f32.mxu0 0.0
    %316 = vmatmul.mubr.f32.gmra.mrb[0].mxu0 %v56
    %v317 = vpop.f32.mrb[0].mxu0
    %v318 = vadd.f32 %v114, %v317
    %v319 = vpop.f32.mrb[0].mxu0
    %320 = vmatprep.mubr.f32.mxu0 0.0
    %321 = vmatmul.mubr.f32.gmra.mrb[0].mxu0 %v57
    %v322 = vpop.f32.mrb[0].mxu0
    %v323 = vadd.f32 %v114, %v322
    %v324 = vpop.f32.mrb[0].mxu0
    %325 = vmatprep.mubr.f32.mxu0 0.0
    %326 = vmatmul.mubr.f32.gmra.mrb[0].mxu0 %v58
    %v327 = vpop.f32.mrb[0].mxu0
    %v328 = vadd.f32 %v114, %v327
    %v329 = vpop.f32.mrb[0].mxu0
    %330 = vmatprep.mubr.f32.mxu0 0.0
    %331 = vmatmul.mubr.f32.gmra.mrb[0].mxu0 %v59
    %v332 = vpop.f32.mrb[0].mxu0
    %v333 = vadd.f32 %v114, %v332
    %v334 = vpop.f32.mrb[0].mxu0
    %335 = vmatprep.mubr.f32.mxu0 0.0
    %336 = vmatmul.mubr.f32.gmra.mrb[0].mxu0 %v60
    %v337 = vpop.f32.mrb[0].mxu0
    %v338 = vadd.f32 %v114, %v337
    %v339 = vpop.f32.mrb[0].mxu0
    %340 = vmatprep.mubr.f32.mxu0 0.0
    %341 = vmatmul.mubr.f32.gmra.mrb[0].mxu0 %v61
    %v342 = vpop.f32.mrb[0].mxu0
    %v343 = vadd.f32 %v114, %v342
    %v344 = vpop.f32.mrb[0].mxu0
    %345 = vmatprep.mubr.f32.mxu0 0.0
    %346 = vmatmul.mubr.f32.gmra.mrb[0].mxu0 %v62
    %v347 = vpop.f32.mrb[0].mxu0
    %v348 = vadd.f32 %v114, %v347
    %v349 = vpop.f32.mrb[0].mxu0
    %350 = vmatprep.mubr.f32.mxu0 0.0
    %351 = vmatmul.mubr.f32.gmra.mrb[0].mxu0 %v63
    %v352 = vpop.f32.mrb[0].mxu0
    %v353 = vadd.f32 %v114, %v352
    %v354 = vpop.f32.mrb[0].mxu0
    %355 = vmatprep.mubr.f32.mxu0 0.0
    %356 = vmatmul.mubr.f32.gmra.mrb[0].mxu0 %v64
    %v357 = vpop.f32.mrb[0].mxu0
    %v358 = vadd.f32 %v114, %v357
    %v359 = vpop.f32.mrb[0].mxu0
    %360 = vmatprep.mubr.f32.mxu0 0.0
    %361 = vmatmul.mubr.f32.gmra.mrb[0].mxu0 %v65
    %v362 = vpop.f32.mrb[0].mxu0
    %v363 = vadd.f32 %v114, %v362
    %v364 = vpop.f32.mrb[0].mxu0
    %365 = vmatprep.mubr.f32.mxu0 0.0
    %366 = vmatmul.mubr.f32.gmra.mrb[0].mxu0 %v66
    %v367 = vpop.f32.mrb[0].mxu0
    %v368 = vadd.f32 %v114, %v367
    %v369 = vpop.f32.mrb[0].mxu0
    %370 = vmatprep.mubr.f32.mxu0 0.0
    %371 = vmatmul.mubr.f32.gmra.mrb[0].mxu0 %v67
    %v372 = vpop.f32.mrb[0].mxu0
    %v373 = vadd.f32 %v114, %v372
    %v374 = vpop.f32.mrb[0].mxu0
    %375 = vmatprep.mubr.f32.mxu0 0.0
    %376 = vmatmul.mubr.f32.gmra.mrb[0].mxu0 %v68
    %v377 = vpop.f32.mrb[0].mxu0
    %v378 = vadd.f32 %v114, %v377
    %v379 = vpop.f32.mrb[0].mxu0
    %380 = vmatprep.mubr.f32.mxu0 0.0
    %381 = vmatmul.mubr.f32.gmra.mrb[0].mxu0 %v69
    %v382 = vpop.f32.mrb[0].mxu0
    %v383 = vadd.f32 %v114, %v382
    %v384 = vpop.f32.mrb[0].mxu0
    %385 = vmatprep.mubr.f32.mxu0 0.0
    %386 = vmatmul.mubr.f32.gmra.mrb[0].mxu0 %v70
    %v387 = vpop.f32.mrb[0].mxu0
    %v388 = vadd.f32 %v114, %v387
    %v389 = vpop.f32.mrb[0].mxu0
    %390 = vmatprep.mubr.f32.mxu0 0.0
    %391 = vmatmul.mubr.f32.gmra.mrb[0].mxu0 %v71
    %v392 = vpop.f32.mrb[0].mxu0
    %v393 = vadd.f32 %v114, %v392
    %v394 = vpop.f32.mrb[0].mxu0
    %395 = vmatprep.mubr.f32.mxu0 0.0
    %396 = vmatmul.mubr.f32.gmra.mrb[0].mxu0 %v72
    %v397 = vpop.f32.mrb[0].mxu0
    %v398 = vadd.f32 %v114, %v397
    %v399 = vpop.f32.mrb[0].mxu0
    %400 = vmatprep.mubr.f32.mxu0 0.0
    %401 = vmatmul.mubr.f32.gmra.mrb[0].mxu0 %v73
    %v402 = vpop.f32.mrb[0].mxu0
    %v403 = vadd.f32 %v114, %v402
    %v404 = vpop.f32.mrb[0].mxu0
    %405 = vmatprep.mubr.f32.mxu0 0.0
    %406 = vmatmul.mubr.f32.gmra.mrb[0].mxu0 %v74
    %v407 = vpop.f32.mrb[0].mxu0
    %v408 = vadd.f32 %v114, %v407
    %v409 = vpop.f32.mrb[0].mxu0
    %410 = vmatprep.mubr.f32.mxu0 0.0
    %411 = vmatmul.mubr.f32.gmra.mrb[0].mxu0 %v75
    %v412 = vpop.f32.mrb[0].mxu0
    %v413 = vadd.f32 %v114, %v412
    %v414 = vpop.f32.mrb[0].mxu0
    %415 = vmatprep.mubr.f32.mxu0 0.0
    %416 = vmatmul.mubr.f32.gmra.mrb[0].mxu0 %v76
    %v417 = vpop.f32.mrb[0].mxu0
    %v418 = vadd.f32 %v114, %v417
    %v419 = vpop.f32.mrb[0].mxu0
    %420 = vmatprep.mubr.f32.mxu0 0.0
    %421 = vmatmul.mubr.f32.gmra.mrb[0].mxu0 %v77
    %v422 = vpop.f32.mrb[0].mxu0
    %v423 = vadd.f32 %v114, %v422
    %v424 = vpop.f32.mrb[0].mxu0
    %425 = vmatprep.mubr.f32.mxu0 0.0
    %426 = vmatmul.mubr.f32.gmra.mrb[0].mxu0 %v78
    %v427 = vpop.f32.mrb[0].mxu0
    %v428 = vadd.f32 %v114, %v427
    %v429 = vpop.f32.mrb[0].mxu0
    %430 = vmatprep.mubr.f32.mxu0 0.0
    %431 = vmatmul.mubr.f32.gmra.mrb[0].mxu0 %v79
    %v432 = vpop.f32.mrb[0].mxu0
    %v433 = vadd.f32 %v114, %v432
    %v434 = vpop.f32.mrb[0].mxu0
    %435 = vmatprep.mubr.f32.mxu0 0.0
    %436 = vmatmul.mubr.f32.gmra.mrb[0].mxu0 %v80
    %v437 = vpop.f32.mrb[0].mxu0
    %v438 = vadd.f32 %v114, %v437
    %v439 = vpop.f32.mrb[0].mxu0
    %440 = vmatprep.mubr.f32.mxu0 0.0
    %441 = vmatmul.mubr.f32.gmra.mrb[0].mxu0 %v81
    %v442 = vpop.f32.mrb[0].mxu0
    %v443 = vadd.f32 %v114, %v442
    %v444 = vpop.f32.mrb[0].mxu0
    %445 = vmatprep.mubr.f32.mxu0 0.0
    %446 = vmatmul.mubr.f32.gmra.mrb[0].mxu0 %v82
    %v447 = vpop.f32.mrb[0].mxu0
    %v448 = vadd.f32 %v114, %v447
    %v449 = vpop.f32.mrb[0].mxu0
    %450 = vmatprep.mubr.f32.mxu0 0.0
    %451 = vmatmul.mubr.f32.gmra.mrb[0].mxu0 %v83
    %v452 = vpop.f32.mrb[0].mxu0
    %v453 = vadd.f32 %v114, %v452
    %v454 = vpop.f32.mrb[0].mxu0
    %455 = vmatprep.mubr.f32.mxu0 0.0
    %456 = vmatmul.mubr.f32.gmra.mrb[0].mxu0 %v84
    %v457 = vpop.f32.mrb[0].mxu0
    %v458 = vadd.f32 %v114, %v457
    %v459 = vpop.f32.mrb[0].mxu0
    %460 = vmatprep.mubr.f32.mxu0 0.0
    %461 = vmatmul.mubr.f32.gmra.mrb[0].mxu0 %v85
    %v462 = vpop.f32.mrb[0].mxu0
    %v463 = vadd.f32 %v114, %v462
    %v464 = vpop.f32.mrb[0].mxu0
    %465 = vmatprep.mubr.f32.mxu0 0.0
    %466 = vmatmul.mubr.f32.gmra.mrb[0].mxu0 %v86
    %v467 = vpop.f32.mrb[0].mxu0
    %v468 = vadd.f32 %v114, %v467
    %v469 = vpop.f32.mrb[0].mxu0
    %470 = vmatprep.mubr.f32.mxu0 0.0
    %471 = vmatmul.mubr.f32.gmra.mrb[0].mxu0 %v87
    %v472 = vpop.f32.mrb[0].mxu0
    %v473 = vadd.f32 %v114, %v472
    %v474 = vpop.f32.mrb[0].mxu0
    %475 = vmatprep.mubr.f32.mxu0 0.0
    %476 = vmatmul.mubr.f32.gmra.mrb[0].mxu0 %v88
    %v477 = vpop.f32.mrb[0].mxu0
    %v478 = vadd.f32 %v114, %v477
    %v479 = vpop.f32.mrb[0].mxu0
    %480 = vmatprep.mubr.f32.mxu0 0.0
    %481 = vmatmul.mubr.f32.gmra.mrb[0].mxu0 %v89
    %v482 = vpop.f32.mrb[0].mxu0
    %v483 = vadd.f32 %v114, %v482
    %v484 = vpop.f32.mrb[0].mxu0
    %485 = vmatprep.mubr.f32.mxu0 0.0
    %486 = vmatmul.mubr.f32.gmra.mrb[0].mxu0 %v90
    %v487 = vpop.f32.mrb[0].mxu0
    %v488 = vadd.f32 %v114, %v487
    %v489 = vpop.f32.mrb[0].mxu0
    %490 = vmatprep.mubr.f32.mxu0 0.0
    %491 = vmatmul.mubr.f32.gmra.mrb[0].mxu0 %v91
    %v492 = vpop.f32.mrb[0].mxu0
    %v493 = vadd.f32 %v114, %v492
    %v494 = vpop.f32.mrb[0].mxu0
    %495 = vmatprep.mubr.f32.mxu0 0.0
    %496 = vmatmul.mubr.f32.gmra.mrb[0].mxu0 %v92
    %v497 = vpop.f32.mrb[0].mxu0
    %v498 = vadd.f32 %v114, %v497
    %v499 = vpop.f32.mrb[0].mxu0
    %500 = vdwg.mxu0
    %v501 = vmax.f32 %v183, 0.0
    %v502 = vmax.f32 %v188, 0.0
    %v503 = vmax.f32 %v193, 0.0
    %v504 = vmax.f32 %v198, 0.0
    %v505 = vmax.f32 %v203, 0.0
    %v506 = vmax.f32 %v208, 0.0
    %v507 = vmax.f32 %v213, 0.0
    %v508 = vmax.f32 %v218, 0.0
    %v509 = vmax.f32 %v223, 0.0
    %v510 = vmax.f32 %v228, 0.0
    %v511 = vmax.f32 %v233, 0.0
    %v512 = vmax.f32 %v238, 0.0
    %v513 = vmax.f32 %v243, 0.0
    %v514 = vmax.f32 %v248, 0.0
    %v515 = vmax.f32 %v253, 0.0
    %v516 = vmax.f32 %v258, 0.0
    %v517 = vmax.f32 %v263, 0.0
    %v518 = vmax.f32 %v268, 0.0
    %v519 = vmax.f32 %v273, 0.0
    %v520 = vmax.f32 %v278, 0.0
    %v521 = vmax.f32 %v283, 0.0
    %v522 = vmax.f32 %v288, 0.0
    %v523 = vmax.f32 %v293, 0.0
    %v524 = vmax.f32 %v298, 0.0
    %v525 = vmax.f32 %v303, 0.0
    %v526 = vmax.f32 %v308, 0.0
    %v527 = vmax.f32 %v313, 0.0
    %v528 = vmax.f32 %v318, 0.0
    %v529 = vmax.f32 %v323, 0.0
    %v530 = vmax.f32 %v328, 0.0
    %v531 = vmax.f32 %v333, 0.0
    %v532 = vmax.f32 %v338, 0.0
    %v533 = vmax.f32 %v343, 0.0
    %v534 = vmax.f32 %v348, 0.0
    %v535 = vmax.f32 %v353, 0.0
    %v536 = vmax.f32 %v358, 0.0
    %v537 = vmax.f32 %v363, 0.0
    %v538 = vmax.f32 %v368, 0.0
    %v539 = vmax.f32 %v373, 0.0
    %v540 = vmax.f32 %v378, 0.0
    %v541 = vmax.f32 %v383, 0.0
    %v542 = vmax.f32 %v388, 0.0
    %v543 = vmax.f32 %v393, 0.0
    %v544 = vmax.f32 %v398, 0.0
    %v545 = vmax.f32 %v403, 0.0
    %v546 = vmax.f32 %v408, 0.0
    %v547 = vmax.f32 %v413, 0.0
    %v548 = vmax.f32 %v418, 0.0
    %v549 = vmax.f32 %v423, 0.0
    %v550 = vmax.f32 %v428, 0.0
    %v551 = vmax.f32 %v433, 0.0
    %v552 = vmax.f32 %v438, 0.0
    %v553 = vmax.f32 %v443, 0.0
    %v554 = vmax.f32 %v448, 0.0
    %v555 = vmax.f32 %v453, 0.0
    %v556 = vmax.f32 %v458, 0.0
    %v557 = vmax.f32 %v463, 0.0
    %v558 = vmax.f32 %v468, 0.0
    %v559 = vmax.f32 %v473, 0.0
    %v560 = vmax.f32 %v478, 0.0
    %v561 = vmax.f32 %v483, 0.0
    %v562 = vmax.f32 %v488, 0.0
    %v563 = vmax.f32 %v493, 0.0
    %v564 = vmax.f32 %v498, 0.0
    %565 = vst [vmem:[#allocation2] sm:$0xff] %v501
    %566 = vst [vmem:[#allocation2 + $0x8] sm:$0xff] %v502
    %567 = vst [vmem:[#allocation2 + $0x10] sm:$0xff] %v503
    %568 = vst [vmem:[#allocation2 + $0x18] sm:$0xff] %v504
    %569 = vst [vmem:[#allocation2 + $0x20] sm:$0xff] %v505
    %570 = vst [vmem:[#allocation2 + $0x28] sm:$0xff] %v506
    %571 = vst [vmem:[#allocation2 + $0x30] sm:$0xff] %v507
    %572 = vst [vmem:[#allocation2 + $0x38] sm:$0xff] %v508
    %573 = vst [vmem:[#allocation2 + $0x40] sm:$0xff] %v509
    %574 = vst [vmem:[#allocation2 + $0x48] sm:$0xff] %v510
    %575 = vst [vmem:[#allocation2 + $0x50] sm:$0xff] %v511
    %576 = vst [vmem:[#allocation2 + $0x58] sm:$0xff] %v512
    %577 = vst [vmem:[#allocation2 + $0x60] sm:$0xff] %v513
    %578 = vst [vmem:[#allocation2 + $0x68] sm:$0xff] %v514
    %579 = vst [vmem:[#allocation2 + $0x70] sm:$0xff] %v515
    %580 = vst [vmem:[#allocation2 + $0x78] sm:$0xff] %v516
    %581 = vst [vmem:[#allocation2 + $0x80] sm:$0xff] %v517
    %582 = vst [vmem:[#allocation2 + $0x88] sm:$0xff] %v518
    %583 = vst [vmem:[#allocation2 + $0x90] sm:$0xff] %v519
    %584 = vst [vmem:[#allocation2 + $0x98] sm:$0xff] %v520
    %585 = vst [vmem:[#allocation2 + $0xa0] sm:$0xff] %v521
    %586 = vst [vmem:[#allocation2 + $0xa8] sm:$0xff] %v522
    %587 = vst [vmem:[#allocation2 + $0xb0] sm:$0xff] %v523
    %588 = vst [vmem:[#allocation2 + $0xb8] sm:$0xff] %v524
    %589 = vst [vmem:[#allocation2 + $0xc0] sm:$0xff] %v525
    %590 = vst [vmem:[#allocation2 + $0xc8] sm:$0xff] %v526
    %591 = vst [vmem:[#allocation2 + $0xd0] sm:$0xff] %v527
    %592 = vst [vmem:[#allocation2 + $0xd8] sm:$0xff] %v528
    %593 = vst [vmem:[#allocation2 + $0xe0] sm:$0xff] %v529
    %594 = vst [vmem:[#allocation2 + $0xe8] sm:$0xff] %v530
    %595 = vst [vmem:[#allocation2 + $0xf0] sm:$0xff] %v531
    %596 = vst [vmem:[#allocation2 + $0xf8] sm:$0xff] %v532
    %597 = vst [vmem:[#allocation2 + $0x100] sm:$0xff] %v533
    %598 = vst [vmem:[#allocation2 + $0x108] sm:$0xff] %v534
    %599 = vst [vmem:[#allocation2 + $0x110] sm:$0xff] %v535
    %600 = vst [vmem:[#allocation2 + $0x118] sm:$0xff] %v536
    %601 = vst [vmem:[#allocation2 + $0x120] sm:$0xff] %v537
    %602 = vst [vmem:[#allocation2 + $0x128] sm:$0xff] %v538
    %603 = vst [vmem:[#allocation2 + $0x130] sm:$0xff] %v539
    %604 = vst [vmem:[#allocation2 + $0x138] sm:$0xff] %v540
    %605 = vst [vmem:[#allocation2 + $0x140] sm:$0xff] %v541
    %606 = vst [vmem:[#allocation2 + $0x148] sm:$0xff] %v542
    %607 = vst [vmem:[#allocation2 + $0x150] sm:$0xff] %v543
    %608 = vst [vmem:[#allocation2 + $0x158] sm:$0xff] %v544
    %609 = vst [vmem:[#allocation2 + $0x160] sm:$0xff] %v545
    %610 = vst [vmem:[#allocation2 + $0x168] sm:$0xff] %v546
    %611 = vst [vmem:[#allocation2 + $0x170] sm:$0xff] %v547
    %612 = vst [vmem:[#allocation2 + $0x178] sm:$0xff] %v548
    %613 = vst [vmem:[#allocation2 + $0x180] sm:$0xff] %v549
    %614 = vst [vmem:[#allocation2 + $0x188] sm:$0xff] %v550
    %615 = vst [vmem:[#allocation2 + $0x190] sm:$0xff] %v551
    %616 = vst [vmem:[#allocation2 + $0x198] sm:$0xff] %v552
    %617 = vst [vmem:[#allocation2 + $0x1a0] sm:$0xff] %v553
    %618 = vst [vmem:[#allocation2 + $0x1a8] sm:$0xff] %v554
    %619 = vst [vmem:[#allocation2 + $0x1b0] sm:$0xff] %v555
    %620 = vst [vmem:[#allocation2 + $0x1b8] sm:$0xff] %v556
    %621 = vst [vmem:[#allocation2 + $0x1c0] sm:$0xff] %v557
    %622 = vst [vmem:[#allocation2 + $0x1c8] sm:$0xff] %v558
    %623 = vst [vmem:[#allocation2 + $0x1d0] sm:$0xff] %v559
    %624 = vst [vmem:[#allocation2 + $0x1d8] sm:$0xff] %v560
    %625 = vst [vmem:[#allocation2 + $0x1e0] sm:$0xff] %v561
    %626 = vst [vmem:[#allocation2 + $0x1e8] sm:$0xff] %v562
    %627 = vst [vmem:[#allocation2 + $0x1f0] sm:$0xff] %v563
    %628 = vst [vmem:[#allocation2 + $0x1f8] sm:$0xff] %v564
    %v629 = vld [vmem:[#allocation2] ss:$2 sm:$0xff]
    %s630 = scalar_lea.vmem [#allocation2], 16
    %v631 = vld [vmem:[%s630] ss:$2 sm:$0xff]
    %s632 = scalar_lea.vmem [#allocation2], 32
    %v633 = vld [vmem:[%s632] ss:$2 sm:$0xff]
    %s634 = scalar_lea.vmem [#allocation2], 48
    %v635 = vld [vmem:[%s634] ss:$2 sm:$0xff]
    %s636 = scalar_lea.vmem [#allocation2], 64
    %v637 = vld [vmem:[%s636] ss:$2 sm:$0xff]
    %s638 = scalar_lea.vmem [#allocation2], 80
    %v639 = vld [vmem:[%s638] ss:$2 sm:$0xff]
    %s640 = scalar_lea.vmem [#allocation2], 96
    %v641 = vld [vmem:[%s640] ss:$2 sm:$0xff]
    %s642 = scalar_lea.vmem [#allocation2], 112
    %v643 = vld [vmem:[%s642] ss:$2 sm:$0xff]
    %s644 = scalar_lea.vmem [#allocation2], 128
    %v645 = vld [vmem:[%s644] ss:$2 sm:$0xff]
    %s646 = scalar_lea.vmem [#allocation2], 144
    %v647 = vld [vmem:[%s646] ss:$2 sm:$0xff]
    %s648 = scalar_lea.vmem [#allocation2], 160
    %v649 = vld [vmem:[%s648] ss:$2 sm:$0xff]
    %s650 = scalar_lea.vmem [#allocation2], 176
    %v651 = vld [vmem:[%s650] ss:$2 sm:$0xff]
    %s652 = scalar_lea.vmem [#allocation2], 192
    %v653 = vld [vmem:[%s652] ss:$2 sm:$0xff]
    %s654 = scalar_lea.vmem [#allocation2], 208
    %v655 = vld [vmem:[%s654] ss:$2 sm:$0xff]
    %s656 = scalar_lea.vmem [#allocation2], 224
    %v657 = vld [vmem:[%s656] ss:$2 sm:$0xff]
    %s658 = scalar_lea.vmem [#allocation2], 240
    %v659 = vld [vmem:[%s658] ss:$2 sm:$0xff]
    %s660 = scalar_lea.vmem [#allocation2], 256
    %v661 = vld [vmem:[%s660] ss:$2 sm:$0xff]
    %s662 = scalar_lea.vmem [#allocation2], 272
    %v663 = vld [vmem:[%s662] ss:$2 sm:$0xff]
    %s664 = scalar_lea.vmem [#allocation2], 288
    %v665 = vld [vmem:[%s664] ss:$2 sm:$0xff]
    %s666 = scalar_lea.vmem [#allocation2], 304
    %v667 = vld [vmem:[%s666] ss:$2 sm:$0xff]
    %s668 = scalar_lea.vmem [#allocation2], 320
    %v669 = vld [vmem:[%s668] ss:$2 sm:$0xff]
    %s670 = scalar_lea.vmem [#allocation2], 336
    %v671 = vld [vmem:[%s670] ss:$2 sm:$0xff]
    %s672 = scalar_lea.vmem [#allocation2], 352
    %v673 = vld [vmem:[%s672] ss:$2 sm:$0xff]
    %s674 = scalar_lea.vmem [#allocation2], 368
    %v675 = vld [vmem:[%s674] ss:$2 sm:$0xff]
    %s676 = scalar_lea.vmem [#allocation2], 384
    %v677 = vld [vmem:[%s676] ss:$2 sm:$0xff]
    %s678 = scalar_lea.vmem [#allocation2], 400
    %v679 = vld [vmem:[%s678] ss:$2 sm:$0xff]
    %s680 = scalar_lea.vmem [#allocation2], 416
    %v681 = vld [vmem:[%s680] ss:$2 sm:$0xff]
    %s682 = scalar_lea.vmem [#allocation2], 432
    %v683 = vld [vmem:[%s682] ss:$2 sm:$0xff]
    %s684 = scalar_lea.vmem [#allocation2], 448
    %v685 = vld [vmem:[%s684] ss:$2 sm:$0xff]
    %s686 = scalar_lea.vmem [#allocation2], 464
    %v687 = vld [vmem:[%s686] ss:$2 sm:$0xff]
    %s688 = scalar_lea.vmem [#allocation2], 480
    %v689 = vld [vmem:[%s688] ss:$2 sm:$0xff]
    %s690 = scalar_lea.vmem [#allocation2], 496
    %v691 = vld [vmem:[%s690] ss:$2 sm:$0xff]
    %s692 = scalar_lea.vmem [#allocation2], 1
    %v693 = vld [vmem:[%s692] ss:$2 sm:$0xff]
    %s694 = scalar_lea.vmem [#allocation2], 17
    %v695 = vld [vmem:[%s694] ss:$2 sm:$0xff]
    %s696 = scalar_lea.vmem [#allocation2], 33
    %v697 = vld [vmem:[%s696] ss:$2 sm:$0xff]
    %s698 = scalar_lea.vmem [#allocation2], 49
    %v699 = vld [vmem:[%s698] ss:$2 sm:$0xff]
    %s700 = scalar_lea.vmem [#allocation2], 65
    %v701 = vld [vmem:[%s700] ss:$2 sm:$0xff]
    %s702 = scalar_lea.vmem [#allocation2], 81
    %v703 = vld [vmem:[%s702] ss:$2 sm:$0xff]
    %s704 = scalar_lea.vmem [#allocation2], 97
    %v705 = vld [vmem:[%s704] ss:$2 sm:$0xff]
    %s706 = scalar_lea.vmem [#allocation2], 113
    %v707 = vld [vmem:[%s706] ss:$2 sm:$0xff]
    %s708 = scalar_lea.vmem [#allocation2], 129
    %v709 = vld [vmem:[%s708] ss:$2 sm:$0xff]
    %s710 = scalar_lea.vmem [#allocation2], 145
    %v711 = vld [vmem:[%s710] ss:$2 sm:$0xff]
    %s712 = scalar_lea.vmem [#allocation2], 161
    %v713 = vld [vmem:[%s712] ss:$2 sm:$0xff]
    %s714 = scalar_lea.vmem [#allocation2], 177
    %v715 = vld [vmem:[%s714] ss:$2 sm:$0xff]
    %s716 = scalar_lea.vmem [#allocation2], 193
    %v717 = vld [vmem:[%s716] ss:$2 sm:$0xff]
    %s718 = scalar_lea.vmem [#allocation2], 209
    %v719 = vld [vmem:[%s718] ss:$2 sm:$0xff]
    %s720 = scalar_lea.vmem [#allocation2], 225
    %v721 = vld [vmem:[%s720] ss:$2 sm:$0xff]
    %s722 = scalar_lea.vmem [#allocation2], 241
    %v723 = vld [vmem:[%s722] ss:$2 sm:$0xff]
    %s724 = scalar_lea.vmem [#allocation2], 257
    %v725 = vld [vmem:[%s724] ss:$2 sm:$0xff]
    %s726 = scalar_lea.vmem [#allocation2], 273
    %v727 = vld [vmem:[%s726] ss:$2 sm:$0xff]
    %s728 = scalar_lea.vmem [#allocation2], 289
    %v729 = vld [vmem:[%s728] ss:$2 sm:$0xff]
    %s730 = scalar_lea.vmem [#allocation2], 305
    %v731 = vld [vmem:[%s730] ss:$2 sm:$0xff]
    %s732 = scalar_lea.vmem [#allocation2], 321
    %v733 = vld [vmem:[%s732] ss:$2 sm:$0xff]
    %s734 = scalar_lea.vmem [#allocation2], 337
    %v735 = vld [vmem:[%s734] ss:$2 sm:$0xff]
    %s736 = scalar_lea.vmem [#allocation2], 353
    %v737 = vld [vmem:[%s736] ss:$2 sm:$0xff]
    %s738 = scalar_lea.vmem [#allocation2], 369
    %v739 = vld [vmem:[%s738] ss:$2 sm:$0xff]
    %s740 = scalar_lea.vmem [#allocation2], 385
    %v741 = vld [vmem:[%s740] ss:$2 sm:$0xff]
    %s742 = scalar_lea.vmem [#allocation2], 401
    %v743 = vld [vmem:[%s742] ss:$2 sm:$0xff]
    %s744 = scalar_lea.vmem [#allocation2], 417
    %v745 = vld [vmem:[%s744] ss:$2 sm:$0xff]
    %s746 = scalar_lea.vmem [#allocation2], 433
    %v747 = vld [vmem:[%s746] ss:$2 sm:$0xff]
    %s748 = scalar_lea.vmem [#allocation2], 449
    %v749 = vld [vmem:[%s748] ss:$2 sm:$0xff]
    %s750 = scalar_lea.vmem [#allocation2], 465
    %v751 = vld [vmem:[%s750] ss:$2 sm:$0xff]
    %s752 = scalar_lea.vmem [#allocation2], 481
    %v753 = vld [vmem:[%s752] ss:$2 sm:$0xff]
    %s754 = scalar_lea.vmem [#allocation2], 497
    %v755 = vld [vmem:[%s754] ss:$2 sm:$0xff]
    %v756 = vmax.f32 %v629, %v693
    %v757 = vmax.f32 %v631, %v695
    %v758 = vmax.f32 %v633, %v697
    %v759 = vmax.f32 %v635, %v699
    %v760 = vmax.f32 %v637, %v701
    %v761 = vmax.f32 %v639, %v703
    %v762 = vmax.f32 %v641, %v705
    %v763 = vmax.f32 %v643, %v707
    %v764 = vmax.f32 %v645, %v709
    %v765 = vmax.f32 %v647, %v711
    %v766 = vmax.f32 %v649, %v713
    %v767 = vmax.f32 %v651, %v715
    %v768 = vmax.f32 %v653, %v717
    %v769 = vmax.f32 %v655, %v719
    %v770 = vmax.f32 %v657, %v721
    %v771 = vmax.f32 %v659, %v723
    %v772 = vmax.f32 %v661, %v725
    %v773 = vmax.f32 %v663, %v727
    %v774 = vmax.f32 %v665, %v729
    %v775 = vmax.f32 %v667, %v731
    %v776 = vmax.f32 %v669, %v733
    %v777 = vmax.f32 %v671, %v735
    %v778 = vmax.f32 %v673, %v737
    %v779 = vmax.f32 %v675, %v739
    %v780 = vmax.f32 %v677, %v741
    %v781 = vmax.f32 %v679, %v743
    %v782 = vmax.f32 %v681, %v745
    %v783 = vmax.f32 %v683, %v747
    %v784 = vmax.f32 %v685, %v749
    %v785 = vmax.f32 %v687, %v751
    %v786 = vmax.f32 %v689, %v753
    %v787 = vmax.f32 %v691, %v755
    %v788 = vmax.f32 %v756, %v757
    %v789 = vmax.f32 %v758, %v759
    %v790 = vmax.f32 %v760, %v761
    %v791 = vmax.f32 %v762, %v763
    %v792 = vmax.f32 %v764, %v765
    %v793 = vmax.f32 %v766, %v767
    %v794 = vmax.f32 %v768, %v769
    %v795 = vmax.f32 %v770, %v771
    %v796 = vmax.f32 %v772, %v773
    %v797 = vmax.f32 %v774, %v775
    %v798 = vmax.f32 %v776, %v777
    %v799 = vmax.f32 %v778, %v779
    %v800 = vmax.f32 %v780, %v781
    %v801 = vmax.f32 %v782, %v783
    %v802 = vmax.f32 %v784, %v785
    %v803 = vmax.f32 %v786, %v787
    %804 = vst [vmem:[#allocation3] sm:$0xff] 0.0
    %805 = vst [vmem:[#allocation3 + $0x8] sm:$0x3] 0.0
    %806 = vst [vmem:[#allocation3 + $0x10] sm:$0xff] 0.0
    %807 = vst [vmem:[#allocation3 + $0x18] sm:$0x3] 0.0
    %808 = vst [vmem:[#allocation3 + $0x20] sm:$0xff] 0.0
    %809 = vst [vmem:[#allocation3 + $0x28] sm:$0x3] 0.0
    %810 = vst [vmem:[#allocation3 + $0x30] sm:$0xff] 0.0
    %811 = vst [vmem:[#allocation3 + $0x38] sm:$0x3] 0.0
    %812 = vst [vmem:[#allocation3 + $0x40] sm:$0xff] 0.0
    %813 = vst [vmem:[#allocation3 + $0x48] sm:$0x3] 0.0
    %814 = vst [vmem:[#allocation3 + $0x50] sm:$0xff] 0.0
    %815 = vst [vmem:[#allocation3 + $0x58] sm:$0x3] 0.0
    %816 = vst [vmem:[#allocation3 + $0x60] sm:$0xff] 0.0
    %817 = vst [vmem:[#allocation3 + $0x68] sm:$0x3] 0.0
    %818 = vst [vmem:[#allocation3 + $0x70] sm:$0xff] 0.0
    %819 = vst [vmem:[#allocation3 + $0x78] sm:$0x3] 0.0
    %820 = vst [vmem:[#allocation3 + $0x80] sm:$0xff] 0.0
    %821 = vst [vmem:[#allocation3 + $0x88] sm:$0x3] 0.0
    %822 = vst [vmem:[#allocation3 + $0x90] sm:$0xff] 0.0
    %823 = vst [vmem:[#allocation3 + $0x98] sm:$0x3] 0.0
    %824 = vst [vmem:[#allocation3 + $0xa0] sm:$0xff] 0.0
    %825 = vst [vmem:[#allocation3 + $0xa8] sm:$0x3] 0.0
    %826 = vst [vmem:[#allocation3 + $0xb0] sm:$0xff] 0.0
    %827 = vst [vmem:[#allocation3 + $0xb8] sm:$0x3] 0.0
    %828 = vst [vmem:[#allocation3 + $0xc0] sm:$0xff] 0.0
    %829 = vst [vmem:[#allocation3 + $0xc8] sm:$0x3] 0.0
    %830 = vst [vmem:[#allocation3 + $0xd0] sm:$0xff] 0.0
    %831 = vst [vmem:[#allocation3 + $0xd8] sm:$0x3] 0.0
    %832 = vst [vmem:[#allocation3 + $0xe0] sm:$0xff] 0.0
    %833 = vst [vmem:[#allocation3 + $0xe8] sm:$0x3] 0.0
    %834 = vst [vmem:[#allocation3 + $0xf0] sm:$0xff] 0.0
    %835 = vst [vmem:[#allocation3 + $0xf8] sm:$0x3] 0.0
    %836 = vst [vmem:[#allocation3 + $0x100] sm:$0xff] 0.0
    %837 = vst [vmem:[#allocation3 + $0x108] sm:$0x3] 0.0
    %838 = vst [vmem:[#allocation3 + $0x110] sm:$0xff] 0.0
    %839 = vst [vmem:[#allocation3 + $0x118] sm:$0x3] 0.0
    %840 = vst [vmem:[#allocation3 + $0x120] sm:$0xff] 0.0
    %841 = vst [vmem:[#allocation3 + $0x128] sm:$0x3] 0.0
    %842 = vst [vmem:[#allocation3 + $0x130] sm:$0xff] 0.0
    %843 = vst [vmem:[#allocation3 + $0x138] sm:$0x3] 0.0
    %s844 = scalar_lea.vmem [#allocation3], 16
    %845 = vst [vmem:[%s844 + $0x1] sm:$0xff] %v788
    %846 = vst [vmem:[%s844 + $0x11] sm:$0xff] %v789
    %847 = vst [vmem:[%s844 + $0x21] sm:$0xff] %v790
    %848 = vst [vmem:[%s844 + $0x31] sm:$0xff] %v791
    %849 = vst [vmem:[%s844 + $0x41] sm:$0xff] %v792
    %850 = vst [vmem:[%s844 + $0x51] sm:$0xff] %v793
    %851 = vst [vmem:[%s844 + $0x61] sm:$0xff] %v794
    %852 = vst [vmem:[%s844 + $0x71] sm:$0xff] %v795
    %853 = vst [vmem:[%s844 + $0xa1] sm:$0xff] %v796
    %854 = vst [vmem:[%s844 + $0xb1] sm:$0xff] %v797
    %855 = vst [vmem:[%s844 + $0xc1] sm:$0xff] %v798
    %856 = vst [vmem:[%s844 + $0xd1] sm:$0xff] %v799
    %857 = vst [vmem:[%s844 + $0xe1] sm:$0xff] %v800
    %858 = vst [vmem:[%s844 + $0xf1] sm:$0xff] %v801
    %859 = vst [vmem:[%s844 + $0x101] sm:$0xff] %v802
    %860 = vst [vmem:[%s844 + $0x111] sm:$0xff] %v803
    %vm861 = vcmp.ge.s32.totalorder %v28, 0
    %vm862 = vcmp.lt.s32.totalorder %v28, 8
    %vm863 = vmand %vm861, %vm862
    %v864 = vld [vmem:[#allocation3] sm:$0xff]
    %v865 = vld [vmem:[#allocation3 + $0x10] sm:$0xff]
    %v866 = vld [vmem:[#allocation3 + $0x20] sm:$0xff]
    %v867 = vld [vmem:[#allocation3 + $0x30] sm:$0xff]
    %v868 = vld [vmem:[#allocation3 + $0x40] sm:$0xff]
    %v869 = vld [vmem:[#allocation3 + $0x50] sm:$0xff]
    %v870 = vld [vmem:[#allocation3 + $0x60] sm:$0xff]
    %v871 = vld [vmem:[#allocation3 + $0x70] sm:$0xff]
    %v872 = vld [vmem:[#allocation3 + $0xa0] sm:$0xff]
    %v873 = vld [vmem:[#allocation3 + $0xb0] sm:$0xff]
    %v874 = vld [vmem:[#allocation3 + $0xc0] sm:$0xff]
    %v875 = vld [vmem:[#allocation3 + $0xd0] sm:$0xff]
    %v876 = vld [vmem:[#allocation3 + $0xe0] sm:$0xff]
    %v877 = vld [vmem:[#allocation3 + $0xf0] sm:$0xff]
    %v878 = vld [vmem:[#allocation3 + $0x100] sm:$0xff]
    %v879 = vld [vmem:[#allocation3 + $0x110] sm:$0xff]
    %v880 = vsel %vm863, 1, 0
    %vm881 = vcmp.eq.s32.totalorder %v880, 1
    %v882 = vsel %vm881, %v864, 0.0
    %v883 = vsel %vm881, %v865, 0.0
    %v884 = vsel %vm881, %v866, 0.0
    %v885 = vsel %vm881, %v867, 0.0
    %v886 = vsel %vm881, %v868, 0.0
    %v887 = vsel %vm881, %v869, 0.0
    %v888 = vsel %vm881, %v870, 0.0
    %v889 = vsel %vm881, %v871, 0.0
    %v890 = vsel %vm881, %v872, 0.0
    %v891 = vsel %vm881, %v873, 0.0
    %v892 = vsel %vm881, %v874, 0.0
    %v893 = vsel %vm881, %v875, 0.0
    %v894 = vsel %vm881, %v876, 0.0
    %v895 = vsel %vm881, %v877, 0.0
    %v896 = vsel %vm881, %v878, 0.0
    %v897 = vsel %vm881, %v879, 0.0
    %vm898 = vcmp.ge.s32.totalorder %v28, 8
    %vm899 = vcmp.lt.s32.totalorder %v28, 16
    %vm900 = vmand %vm898, %vm899
    %v901 = vld [vmem:[#allocation3 + $0x1] sm:$0xff]
    %v902 = vld [vmem:[#allocation3 + $0x11] sm:$0xff]
    %v903 = vld [vmem:[#allocation3 + $0x21] sm:$0xff]
    %v904 = vld [vmem:[#allocation3 + $0x31] sm:$0xff]
    %v905 = vld [vmem:[#allocation3 + $0x41] sm:$0xff]
    %v906 = vld [vmem:[#allocation3 + $0x51] sm:$0xff]
    %v907 = vld [vmem:[#allocation3 + $0x61] sm:$0xff]
    %v908 = vld [vmem:[#allocation3 + $0x71] sm:$0xff]
    %v909 = vld [vmem:[#allocation3 + $0xa1] sm:$0xff]
    %v910 = vld [vmem:[#allocation3 + $0xb1] sm:$0xff]
    %v911 = vld [vmem:[#allocation3 + $0xc1] sm:$0xff]
    %v912 = vld [vmem:[#allocation3 + $0xd1] sm:$0xff]
    %v913 = vld [vmem:[#allocation3 + $0xe1] sm:$0xff]
    %v914 = vld [vmem:[#allocation3 + $0xf1] sm:$0xff]
    %v915 = vld [vmem:[#allocation3 + $0x101] sm:$0xff]
    %v916 = vld [vmem:[#allocation3 + $0x111] sm:$0xff]
    %v917 = vsel %vm900, 1, 0
    %vm918 = vcmp.eq.s32.totalorder %v917, 1
    %v919 = vsel %vm918, %v901, %v882
    %v920 = vsel %vm918, %v902, %v883
    %v921 = vsel %vm918, %v903, %v884
    %v922 = vsel %vm918, %v904, %v885
    %v923 = vsel %vm918, %v905, %v886
    %v924 = vsel %vm918, %v906, %v887
    %v925 = vsel %vm918, %v907, %v888
    %v926 = vsel %vm918, %v908, %v889
    %v927 = vsel %vm918, %v909, %v890
    %v928 = vsel %vm918, %v910, %v891
    %v929 = vsel %vm918, %v911, %v892
    %v930 = vsel %vm918, %v912, %v893
    %v931 = vsel %vm918, %v913, %v894
    %v932 = vsel %vm918, %v914, %v895
    %v933 = vsel %vm918, %v915, %v896
    %v934 = vsel %vm918, %v916, %v897
    %vm935 = vcmp.ge.s32.totalorder %v28, 16
    %vm936 = vcmp.lt.s32.totalorder %v28, 24
    %vm937 = vmand %vm935, %vm936
    %v938 = vld [vmem:[#allocation3 + $0x2] sm:$0xff]
    %v939 = vld [vmem:[#allocation3 + $0x12] sm:$0xff]
    %v940 = vld [vmem:[#allocation3 + $0x22] sm:$0xff]
    %v941 = vld [vmem:[#allocation3 + $0x32] sm:$0xff]
    %v942 = vld [vmem:[#allocation3 + $0x42] sm:$0xff]
    %v943 = vld [vmem:[#allocation3 + $0x52] sm:$0xff]
    %v944 = vld [vmem:[#allocation3 + $0x62] sm:$0xff]
    %v945 = vld [vmem:[#allocation3 + $0x72] sm:$0xff]
    %v946 = vld [vmem:[#allocation3 + $0xa2] sm:$0xff]
    %v947 = vld [vmem:[#allocation3 + $0xb2] sm:$0xff]
    %v948 = vld [vmem:[#allocation3 + $0xc2] sm:$0xff]
    %v949 = vld [vmem:[#allocation3 + $0xd2] sm:$0xff]
    %v950 = vld [vmem:[#allocation3 + $0xe2] sm:$0xff]
    %v951 = vld [vmem:[#allocation3 + $0xf2] sm:$0xff]
    %v952 = vld [vmem:[#allocation3 + $0x102] sm:$0xff]
    %v953 = vld [vmem:[#allocation3 + $0x112] sm:$0xff]
    %v954 = vsel %vm937, 1, 0
    %vm955 = vcmp.eq.s32.totalorder %v954, 1
    %v956 = vsel %vm955, %v938, %v919
    %v957 = vsel %vm955, %v939, %v920
    %v958 = vsel %vm955, %v940, %v921
    %v959 = vsel %vm955, %v941, %v922
    %v960 = vsel %vm955, %v942, %v923
    %v961 = vsel %vm955, %v943, %v924
    %v962 = vsel %vm955, %v944, %v925
    %v963 = vsel %vm955, %v945, %v926
    %v964 = vsel %vm955, %v946, %v927
    %v965 = vsel %vm955, %v947, %v928
    %v966 = vsel %vm955, %v948, %v929
    %v967 = vsel %vm955, %v949, %v930
    %v968 = vsel %vm955, %v950, %v931
    %v969 = vsel %vm955, %v951, %v932
    %v970 = vsel %vm955, %v952, %v933
    %v971 = vsel %vm955, %v953, %v934
    %vm972 = vcmp.ge.s32.totalorder %v28, 24
    %vm973 = vcmp.lt.s32.totalorder %v28, 32
    %vm974 = vmand %vm972, %vm973
    %v975 = vld [vmem:[%s844] sm:$0xff]
    %v976 = vld [vmem:[%s844 + $0x10] sm:$0xff]
    %v977 = vld [vmem:[%s844 + $0x20] sm:$0xff]
    %v978 = vld [vmem:[%s844 + $0x30] sm:$0xff]
    %v979 = vld [vmem:[%s844 + $0x40] sm:$0xff]
    %v980 = vld [vmem:[%s844 + $0x50] sm:$0xff]
    %v981 = vld [vmem:[%s844 + $0x60] sm:$0xff]
    %v982 = vld [vmem:[%s844 + $0x70] sm:$0xff]
    %v983 = vld [vmem:[%s844 + $0xa0] sm:$0xff]
    %v984 = vld [vmem:[%s844 + $0xb0] sm:$0xff]
    %v985 = vld [vmem:[%s844 + $0xc0] sm:$0xff]
    %v986 = vld [vmem:[%s844 + $0xd0] sm:$0xff]
    %v987 = vld [vmem:[%s844 + $0xe0] sm:$0xff]
    %v988 = vld [vmem:[%s844 + $0xf0] sm:$0xff]
    %v989 = vld [vmem:[%s844 + $0x100] sm:$0xff]
    %v990 = vld [vmem:[%s844 + $0x110] sm:$0xff]
    %v991 = vsel %vm974, 1, 0
    %vm992 = vcmp.eq.s32.totalorder %v991, 1
    %v993 = vsel %vm992, %v975, %v956
    %v994 = vsel %vm992, %v976, %v957
    %v995 = vsel %vm992, %v977, %v958
    %v996 = vsel %vm992, %v978, %v959
    %v997 = vsel %vm992, %v979, %v960
    %v998 = vsel %vm992, %v980, %v961
    %v999 = vsel %vm992, %v981, %v962
    %v1000 = vsel %vm992, %v982, %v963
    %v1001 = vsel %vm992, %v983, %v964
    %v1002 = vsel %vm992, %v984, %v965
    %v1003 = vsel %vm992, %v985, %v966
    %v1004 = vsel %vm992, %v986, %v967
    %v1005 = vsel %vm992, %v987, %v968
    %v1006 = vsel %vm992, %v988, %v969
    %v1007 = vsel %vm992, %v989, %v970
    %v1008 = vsel %vm992, %v990, %v971
    %vm1009 = vcmp.ge.s32.totalorder %v28, 32
    %vm1010 = vcmp.lt.s32.totalorder %v28, 40
    %vm1011 = vmand %vm1009, %vm1010
    %v1012 = vld [vmem:[%s844 + $0x1] sm:$0xff]
    %v1013 = vld [vmem:[%s844 + $0x11] sm:$0xff]
    %v1014 = vld [vmem:[%s844 + $0x21] sm:$0xff]
    %v1015 = vld [vmem:[%s844 + $0x31] sm:$0xff]
    %v1016 = vld [vmem:[%s844 + $0x41] sm:$0xff]
    %v1017 = vld [vmem:[%s844 + $0x51] sm:$0xff]
    %v1018 = vld [vmem:[%s844 + $0x61] sm:$0xff]
    %v1019 = vld [vmem:[%s844 + $0x71] sm:$0xff]
    %v1020 = vld [vmem:[%s844 + $0xa1] sm:$0xff]
    %v1021 = vld [vmem:[%s844 + $0xb1] sm:$0xff]
    %v1022 = vld [vmem:[%s844 + $0xc1] sm:$0xff]
    %v1023 = vld [vmem:[%s844 + $0xd1] sm:$0xff]
    %v1024 = vld [vmem:[%s844 + $0xe1] sm:$0xff]
    %v1025 = vld [vmem:[%s844 + $0xf1] sm:$0xff]
    %v1026 = vld [vmem:[%s844 + $0x101] sm:$0xff]
    %v1027 = vld [vmem:[%s844 + $0x111] sm:$0xff]
    %v1028 = vsel %vm1011, 1, 0
    %vm1029 = vcmp.eq.s32.totalorder %v1028, 1
    %v1030 = vsel %vm1029, %v1012, %v993
    %v1031 = vsel %vm1029, %v1013, %v994
    %v1032 = vsel %vm1029, %v1014, %v995
    %v1033 = vsel %vm1029, %v1015, %v996
    %v1034 = vsel %vm1029, %v1016, %v997
    %v1035 = vsel %vm1029, %v1017, %v998
    %v1036 = vsel %vm1029, %v1018, %v999
    %v1037 = vsel %vm1029, %v1019, %v1000
    %v1038 = vsel %vm1029, %v1020, %v1001
    %v1039 = vsel %vm1029, %v1021, %v1002
    %v1040 = vsel %vm1029, %v1022, %v1003
    %v1041 = vsel %vm1029, %v1023, %v1004
    %v1042 = vsel %vm1029, %v1024, %v1005
    %v1043 = vsel %vm1029, %v1025, %v1006
    %v1044 = vsel %vm1029, %v1026, %v1007
    %v1045 = vsel %vm1029, %v1027, %v1008
    %vm1046 = vcmp.ge.s32.totalorder %v28, 40
    %vm1047 = vcmp.lt.s32.totalorder %v28, 48
    %vm1048 = vmand %vm1046, %vm1047
    %v1049 = vld [vmem:[%s844 + $0x2] sm:$0xff]
    %v1050 = vld [vmem:[%s844 + $0x12] sm:$0xff]
    %v1051 = vld [vmem:[%s844 + $0x22] sm:$0xff]
    %v1052 = vld [vmem:[%s844 + $0x32] sm:$0xff]
    %v1053 = vld [vmem:[%s844 + $0x42] sm:$0xff]
    %v1054 = vld [vmem:[%s844 + $0x52] sm:$0xff]
    %v1055 = vld [vmem:[%s844 + $0x62] sm:$0xff]
    %v1056 = vld [vmem:[%s844 + $0x72] sm:$0xff]
    %v1057 = vld [vmem:[%s844 + $0xa2] sm:$0xff]
    %v1058 = vld [vmem:[%s844 + $0xb2] sm:$0xff]
    %v1059 = vld [vmem:[%s844 + $0xc2] sm:$0xff]
    %v1060 = vld [vmem:[%s844 + $0xd2] sm:$0xff]
    %v1061 = vld [vmem:[%s844 + $0xe2] sm:$0xff]
    %v1062 = vld [vmem:[%s844 + $0xf2] sm:$0xff]
    %v1063 = vld [vmem:[%s844 + $0x102] sm:$0xff]
    %v1064 = vld [vmem:[%s844 + $0x112] sm:$0xff]
    %v1065 = vsel %vm1048, 1, 0
    %vm1066 = vcmp.eq.s32.totalorder %v1065, 1
    %v1067 = vsel %vm1066, %v1049, %v1030
    %v1068 = vsel %vm1066, %v1050, %v1031
    %v1069 = vsel %vm1066, %v1051, %v1032
    %v1070 = vsel %vm1066, %v1052, %v1033
    %v1071 = vsel %vm1066, %v1053, %v1034
    %v1072 = vsel %vm1066, %v1054, %v1035
    %v1073 = vsel %vm1066, %v1055, %v1036
    %v1074 = vsel %vm1066, %v1056, %v1037
    %v1075 = vsel %vm1066, %v1057, %v1038
    %v1076 = vsel %vm1066, %v1058, %v1039
    %v1077 = vsel %vm1066, %v1059, %v1040
    %v1078 = vsel %vm1066, %v1060, %v1041
    %v1079 = vsel %vm1066, %v1061, %v1042
    %v1080 = vsel %vm1066, %v1062, %v1043
    %v1081 = vsel %vm1066, %v1063, %v1044
    %v1082 = vsel %vm1066, %v1064, %v1045
    %vm1083 = vcmp.ge.s32.totalorder %v28, 48
    %vm1084 = vcmp.lt.s32.totalorder %v28, 56
    %vm1085 = vmand %vm1083, %vm1084
    %s1086 = scalar_lea.vmem [#allocation3], 32
    %v1087 = vld [vmem:[%s1086] sm:$0xff]
    %v1088 = vld [vmem:[%s1086 + $0x10] sm:$0xff]
    %v1089 = vld [vmem:[%s1086 + $0x20] sm:$0xff]
    %v1090 = vld [vmem:[%s1086 + $0x30] sm:$0xff]
    %v1091 = vld [vmem:[%s1086 + $0x40] sm:$0xff]
    %v1092 = vld [vmem:[%s1086 + $0x50] sm:$0xff]
    %v1093 = vld [vmem:[%s1086 + $0x60] sm:$0xff]
    %v1094 = vld [vmem:[%s1086 + $0x70] sm:$0xff]
    %v1095 = vld [vmem:[%s1086 + $0xa0] sm:$0xff]
    %v1096 = vld [vmem:[%s1086 + $0xb0] sm:$0xff]
    %v1097 = vld [vmem:[%s1086 + $0xc0] sm:$0xff]
    %v1098 = vld [vmem:[%s1086 + $0xd0] sm:$0xff]
    %v1099 = vld [vmem:[%s1086 + $0xe0] sm:$0xff]
    %v1100 = vld [vmem:[%s1086 + $0xf0] sm:$0xff]
    %v1101 = vld [vmem:[%s1086 + $0x100] sm:$0xff]
    %v1102 = vld [vmem:[%s1086 + $0x110] sm:$0xff]
    %v1103 = vsel %vm1085, 1, 0
    %vm1104 = vcmp.eq.s32.totalorder %v1103, 1
    %v1105 = vsel %vm1104, %v1087, %v1067
    %v1106 = vsel %vm1104, %v1088, %v1068
    %v1107 = vsel %vm1104, %v1089, %v1069
    %v1108 = vsel %vm1104, %v1090, %v1070
    %v1109 = vsel %vm1104, %v1091, %v1071
    %v1110 = vsel %vm1104, %v1092, %v1072
    %v1111 = vsel %vm1104, %v1093, %v1073
    %v1112 = vsel %vm1104, %v1094, %v1074
    %v1113 = vsel %vm1104, %v1095, %v1075
    %v1114 = vsel %vm1104, %v1096, %v1076
    %v1115 = vsel %vm1104, %v1097, %v1077
    %v1116 = vsel %vm1104, %v1098, %v1078
    %v1117 = vsel %vm1104, %v1099, %v1079
    %v1118 = vsel %vm1104, %v1100, %v1080
    %v1119 = vsel %vm1104, %v1101, %v1081
    %v1120 = vsel %vm1104, %v1102, %v1082
    %vm1121 = vcmp.ge.s32.totalorder %v28, 56
    %vm1122 = vcmp.lt.s32.totalorder %v28, 64
    %vm1123 = vmand %vm1121, %vm1122
    %v1124 = vld [vmem:[%s1086 + $0x1] sm:$0xff]
    %v1125 = vld [vmem:[%s1086 + $0x11] sm:$0xff]
    %v1126 = vld [vmem:[%s1086 + $0x21] sm:$0xff]
    %v1127 = vld [vmem:[%s1086 + $0x31] sm:$0xff]
    %v1128 = vld [vmem:[%s1086 + $0x41] sm:$0xff]
    %v1129 = vld [vmem:[%s1086 + $0x51] sm:$0xff]
    %v1130 = vld [vmem:[%s1086 + $0x61] sm:$0xff]
    %v1131 = vld [vmem:[%s1086 + $0x71] sm:$0xff]
    %v1132 = vld [vmem:[%s1086 + $0xa1] sm:$0xff]
    %v1133 = vld [vmem:[%s1086 + $0xb1] sm:$0xff]
    %v1134 = vld [vmem:[%s1086 + $0xc1] sm:$0xff]
    %v1135 = vld [vmem:[%s1086 + $0xd1] sm:$0xff]
    %v1136 = vld [vmem:[%s1086 + $0xe1] sm:$0xff]
    %v1137 = vld [vmem:[%s1086 + $0xf1] sm:$0xff]
    %v1138 = vld [vmem:[%s1086 + $0x101] sm:$0xff]
    %v1139 = vld [vmem:[%s1086 + $0x111] sm:$0xff]
    %v1140 = vsel %vm1123, 1, 0
    %vm1141 = vcmp.eq.s32.totalorder %v1140, 1
    %v1142 = vsel %vm1141, %v1124, %v1105
    %v1143 = vsel %vm1141, %v1125, %v1106
    %v1144 = vsel %vm1141, %v1126, %v1107
    %v1145 = vsel %vm1141, %v1127, %v1108
    %v1146 = vsel %vm1141, %v1128, %v1109
    %v1147 = vsel %vm1141, %v1129, %v1110
    %v1148 = vsel %vm1141, %v1130, %v1111
    %v1149 = vsel %vm1141, %v1131, %v1112
    %v1150 = vsel %vm1141, %v1132, %v1113
    %v1151 = vsel %vm1141, %v1133, %v1114
    %v1152 = vsel %vm1141, %v1134, %v1115
    %v1153 = vsel %vm1141, %v1135, %v1116
    %v1154 = vsel %vm1141, %v1136, %v1117
    %v1155 = vsel %vm1141, %v1137, %v1118
    %v1156 = vsel %vm1141, %v1138, %v1119
    %v1157 = vsel %vm1141, %v1139, %v1120
    %vm1158 = vcmp.ge.s32.totalorder %v28, 64
    %vm1159 = vcmp.lt.s32.totalorder %v28, 72
    %vm1160 = vmand %vm1158, %vm1159
    %v1161 = vld [vmem:[%s1086 + $0x2] sm:$0xff]
    %v1162 = vld [vmem:[%s1086 + $0x12] sm:$0xff]
    %v1163 = vld [vmem:[%s1086 + $0x22] sm:$0xff]
    %v1164 = vld [vmem:[%s1086 + $0x32] sm:$0xff]
    %v1165 = vld [vmem:[%s1086 + $0x42] sm:$0xff]
    %v1166 = vld [vmem:[%s1086 + $0x52] sm:$0xff]
    %v1167 = vld [vmem:[%s1086 + $0x62] sm:$0xff]
    %v1168 = vld [vmem:[%s1086 + $0x72] sm:$0xff]
    %v1169 = vld [vmem:[%s1086 + $0xa2] sm:$0xff]
    %v1170 = vld [vmem:[%s1086 + $0xb2] sm:$0xff]
    %v1171 = vld [vmem:[%s1086 + $0xc2] sm:$0xff]
    %v1172 = vld [vmem:[%s1086 + $0xd2] sm:$0xff]
    %v1173 = vld [vmem:[%s1086 + $0xe2] sm:$0xff]
    %v1174 = vld [vmem:[%s1086 + $0xf2] sm:$0xff]
    %v1175 = vld [vmem:[%s1086 + $0x102] sm:$0xff]
    %v1176 = vld [vmem:[%s1086 + $0x112] sm:$0xff]
    %v1177 = vsel %vm1160, 1, 0
    %vm1178 = vcmp.eq.s32.totalorder %v1177, 1
    %v1179 = vsel %vm1178, %v1161, %v1142
    %v1180 = vsel %vm1178, %v1162, %v1143
    %v1181 = vsel %vm1178, %v1163, %v1144
    %v1182 = vsel %vm1178, %v1164, %v1145
    %v1183 = vsel %vm1178, %v1165, %v1146
    %v1184 = vsel %vm1178, %v1166, %v1147
    %v1185 = vsel %vm1178, %v1167, %v1148
    %v1186 = vsel %vm1178, %v1168, %v1149
    %v1187 = vsel %vm1178, %v1169, %v1150
    %v1188 = vsel %vm1178, %v1170, %v1151
    %v1189 = vsel %vm1178, %v1171, %v1152
    %v1190 = vsel %vm1178, %v1172, %v1153
    %v1191 = vsel %vm1178, %v1173, %v1154
    %v1192 = vsel %vm1178, %v1174, %v1155
    %v1193 = vsel %vm1178, %v1175, %v1156
    %v1194 = vsel %vm1178, %v1176, %v1157
    %v1195 = vld [vmem:[%s3] sm:$0xff]
    %v1196 = vld [vmem:[%s3 + $0x8] sm:$0xff]
    %v1197 = vld [vmem:[%s3 + $0x10] sm:$0xff]
    %v1198 = vld [vmem:[%s3 + $0x18] sm:$0xff]
    %v1199 = vld [vmem:[%s3 + $0x20] sm:$0xff]
    %v1200 = vld [vmem:[%s3 + $0x28] sm:$0xff]
    %v1201 = vld [vmem:[%s3 + $0x30] sm:$0xff]
    %v1202 = vld [vmem:[%s3 + $0x38] sm:$0xff]
    %v1203 = vld [vmem:[%s3 + $0x40] sm:$0xff]
    %v1204 = vld [vmem:[%s3 + $0x48] sm:$0xff]
    %v1205 = vld [vmem:[%s3 + $0x50] sm:$0xff]
    %v1206 = vld [vmem:[%s3 + $0x58] sm:$0xff]
    %v1207 = vld [vmem:[%s3 + $0x60] sm:$0xff]
    %v1208 = vld [vmem:[%s3 + $0x68] sm:$0xff]
    %v1209 = vld [vmem:[%s3 + $0x70] sm:$0xff]
    %v1210 = vld [vmem:[%s3 + $0x78] sm:$0xff]
    %v1211 = vld [vmem:[%s4] sm:$0x1]
    %v1213 = vlaneseq
    %v1214 = vshrl.u32 %v1213, 7
    %v1215 = vsub.s32 0, %v1214
    %v1216 = vrot.slane %v1211, %v1215
    %1218 = vmatprep.subr.mxu0 0.0
    %1219 = vmatpush1.msra.mxu0 %v1195
    %1220 = vmatprep.subr.mxu0 0.0
    %1221 = vmatpush1.msra.mxu0 %v1196
    %1222 = vmatprep.subr.mxu0 0.0
    %1223 = vmatpush1.msra.mxu0 %v1197
    %1224 = vmatprep.subr.mxu0 0.0
    %1225 = vmatpush1.msra.mxu0 %v1198
    %1226 = vmatprep.subr.mxu0 0.0
    %1227 = vmatpush1.msra.mxu0 %v1199
    %1228 = vmatprep.subr.mxu0 0.0
    %1229 = vmatpush1.msra.mxu0 %v1200
    %1230 = vmatprep.subr.mxu0 0.0
    %1231 = vmatpush1.msra.mxu0 %v1201
    %1232 = vmatprep.subr.mxu0 0.0
    %1233 = vmatpush1.msra.mxu0 %v1202
    %1234 = vmatprep.subr.mxu0 0.0
    %1235 = vmatpush1.msra.mxu0 %v1203
    %1236 = vmatprep.subr.mxu0 0.0
    %1237 = vmatpush1.msra.mxu0 %v1204
    %1238 = vmatprep.subr.mxu0 0.0
    %1239 = vmatpush1.msra.mxu0 %v1205
    %1240 = vmatprep.subr.mxu0 0.0
    %1241 = vmatpush1.msra.mxu0 %v1206
    %1242 = vmatprep.subr.mxu0 0.0
    %1243 = vmatpush1.msra.mxu0 %v1207
    %1244 = vmatprep.subr.mxu0 0.0
    %1245 = vmatpush1.msra.mxu0 %v1208
    %1246 = vmatprep.subr.mxu0 0.0
    %1247 = vmatpush1.msra.mxu0 %v1209
    %1248 = vmatprep.subr.mxu0 0.0
    %1249 = vmatpush1.msra.mxu0 %v1210
    %1250 = vmatprep.subr.mxu0 0.0
    %1251 = vmatpush1.msra.mxu0 0.0
    %1252 = vmatprep.subr.mxu0 0.0
    %1253 = vmatpush1.msra.mxu0 0.0
    %1254 = vmatprep.subr.mxu0 0.0
    %1255 = vmatpush1.msra.mxu0 0.0
    %1256 = vmatprep.subr.mxu0 0.0
    %1257 = vmatpush1.msra.mxu0 0.0
    %1258 = vmatprep.subr.mxu0 0.0
    %1259 = vmatpush1.msra.mxu0 0.0
    %1260 = vmatprep.subr.mxu0 0.0
    %1261 = vmatpush1.msra.mxu0 0.0
    %1262 = vmatprep.subr.mxu0 0.0
    %1263 = vmatpush1.msra.mxu0 0.0
    %1264 = vmatprep.subr.mxu0 0.0
    %1265 = vmatpush1.msra.mxu0 0.0
    %1266 = vmatprep.subr.mxu0 0.0
    %1267 = vmatpush1.msra.mxu0 0.0
    %1268 = vmatprep.subr.mxu0 0.0
    %1269 = vmatpush1.msra.mxu0 0.0
    %1270 = vmatprep.subr.mxu0 0.0
    %1271 = vmatpush1.msra.mxu0 0.0
    %1272 = vmatprep.subr.mxu0 0.0
    %1273 = vmatpush1.msra.mxu0 0.0
    %1274 = vmatprep.subr.mxu0 0.0
    %1275 = vmatpush1.msra.mxu0 0.0
    %1276 = vmatprep.subr.mxu0 0.0
    %1277 = vmatpush1.msra.mxu0 0.0
    %1278 = vmatprep.subr.mxu0 0.0
    %1279 = vmatpush1.msra.mxu0 0.0
    %1280 = vmatprep.subr.mxu0 0.0
    %1281 = vmatpush1.msra.mxu0 0.0
    %1282 = vmatprep.mubr.f32.mxu0 0.0
    %1283 = vmatmul.mubr.f32.gmra.mrb[0].mxu0 %v1179
    %v1284 = vpop.f32.mrb[0].mxu0
    %v1285 = vadd.f32 %v1216, %v1284
    %v1286 = vpop.f32.mrb[0].mxu0
    %1287 = vmatprep.mubr.f32.mxu0 0.0
    %1288 = vmatmul.mubr.f32.gmra.mrb[0].mxu0 %v1180
    %v1289 = vpop.f32.mrb[0].mxu0
    %v1290 = vadd.f32 %v1216, %v1289
    %v1291 = vpop.f32.mrb[0].mxu0
    %1292 = vmatprep.mubr.f32.mxu0 0.0
    %1293 = vmatmul.mubr.f32.gmra.mrb[0].mxu0 %v1181
    %v1294 = vpop.f32.mrb[0].mxu0
    %v1295 = vadd.f32 %v1216, %v1294
    %v1296 = vpop.f32.mrb[0].mxu0
    %1297 = vmatprep.mubr.f32.mxu0 0.0
    %1298 = vmatmul.mubr.f32.gmra.mrb[0].mxu0 %v1182
    %v1299 = vpop.f32.mrb[0].mxu0
    %v1300 = vadd.f32 %v1216, %v1299
    %v1301 = vpop.f32.mrb[0].mxu0
    %1302 = vmatprep.mubr.f32.mxu0 0.0
    %1303 = vmatmul.mubr.f32.gmra.mrb[0].mxu0 %v1183
    %v1304 = vpop.f32.mrb[0].mxu0
    %v1305 = vadd.f32 %v1216, %v1304
    %v1306 = vpop.f32.mrb[0].mxu0
    %1307 = vmatprep.mubr.f32.mxu0 0.0
    %1308 = vmatmul.mubr.f32.gmra.mrb[0].mxu0 %v1184
    %v1309 = vpop.f32.mrb[0].mxu0
    %v1310 = vadd.f32 %v1216, %v1309
    %v1311 = vpop.f32.mrb[0].mxu0
    %1312 = vmatprep.mubr.f32.mxu0 0.0
    %1313 = vmatmul.mubr.f32.gmra.mrb[0].mxu0 %v1185
    %v1314 = vpop.f32.mrb[0].mxu0
    %v1315 = vadd.f32 %v1216, %v1314
    %v1316 = vpop.f32.mrb[0].mxu0
    %1317 = vmatprep.mubr.f32.mxu0 0.0
    %1318 = vmatmul.mubr.f32.gmra.mrb[0].mxu0 %v1186
    %v1319 = vpop.f32.mrb[0].mxu0
    %v1320 = vadd.f32 %v1216, %v1319
    %v1321 = vpop.f32.mrb[0].mxu0
    %1322 = vmatprep.mubr.f32.mxu0 0.0
    %1323 = vmatmul.mubr.f32.gmra.mrb[0].mxu0 %v1187
    %v1324 = vpop.f32.mrb[0].mxu0
    %v1325 = vadd.f32 %v1216, %v1324
    %v1326 = vpop.f32.mrb[0].mxu0
    %1327 = vmatprep.mubr.f32.mxu0 0.0
    %1328 = vmatmul.mubr.f32.gmra.mrb[0].mxu0 %v1188
    %v1329 = vpop.f32.mrb[0].mxu0
    %v1330 = vadd.f32 %v1216, %v1329
    %v1331 = vpop.f32.mrb[0].mxu0
    %1332 = vmatprep.mubr.f32.mxu0 0.0
    %1333 = vmatmul.mubr.f32.gmra.mrb[0].mxu0 %v1189
    %v1334 = vpop.f32.mrb[0].mxu0
    %v1335 = vadd.f32 %v1216, %v1334
    %v1336 = vpop.f32.mrb[0].mxu0
    %1337 = vmatprep.mubr.f32.mxu0 0.0
    %1338 = vmatmul.mubr.f32.gmra.mrb[0].mxu0 %v1190
    %v1339 = vpop.f32.mrb[0].mxu0
    %v1340 = vadd.f32 %v1216, %v1339
    %v1341 = vpop.f32.mrb[0].mxu0
    %1342 = vmatprep.mubr.f32.mxu0 0.0
    %1343 = vmatmul.mubr.f32.gmra.mrb[0].mxu0 %v1191
    %v1344 = vpop.f32.mrb[0].mxu0
    %v1345 = vadd.f32 %v1216, %v1344
    %v1346 = vpop.f32.mrb[0].mxu0
    %1347 = vmatprep.mubr.f32.mxu0 0.0
    %1348 = vmatmul.mubr.f32.gmra.mrb[0].mxu0 %v1192
    %v1349 = vpop.f32.mrb[0].mxu0
    %v1350 = vadd.f32 %v1216, %v1349
    %v1351 = vpop.f32.mrb[0].mxu0
    %1352 = vmatprep.mubr.f32.mxu0 0.0
    %1353 = vmatmul.mubr.f32.gmra.mrb[0].mxu0 %v1193
    %v1354 = vpop.f32.mrb[0].mxu0
    %v1355 = vadd.f32 %v1216, %v1354
    %v1356 = vpop.f32.mrb[0].mxu0
    %1357 = vmatprep.mubr.f32.mxu0 0.0
    %1358 = vmatmul.mubr.f32.gmra.mrb[0].mxu0 %v1194
    %v1359 = vpop.f32.mrb[0].mxu0
    %v1360 = vadd.f32 %v1216, %v1359
    %v1361 = vpop.f32.mrb[0].mxu0
    %1362 = vdwg.mxu0
    %v1363 = vmax.f32 %v1285, 0.0
    %v1364 = vmax.f32 %v1290, 0.0
    %v1365 = vmax.f32 %v1295, 0.0
    %v1366 = vmax.f32 %v1300, 0.0
    %v1367 = vmax.f32 %v1305, 0.0
    %v1368 = vmax.f32 %v1310, 0.0
    %v1369 = vmax.f32 %v1315, 0.0
    %v1370 = vmax.f32 %v1320, 0.0
    %v1371 = vmax.f32 %v1325, 0.0
    %v1372 = vmax.f32 %v1330, 0.0
    %v1373 = vmax.f32 %v1335, 0.0
    %v1374 = vmax.f32 %v1340, 0.0
    %v1375 = vmax.f32 %v1345, 0.0
    %v1376 = vmax.f32 %v1350, 0.0
    %v1377 = vmax.f32 %v1355, 0.0
    %v1378 = vmax.f32 %v1360, 0.0
    %v1379 = vsel %vm898, 1, 0
    %v1380 = vsel %vm935, 1, 0
    %v1381 = vadd.s32 %v1379, %v1380
    %v1382 = vsel %vm972, 1, 0
    %v1383 = vadd.s32 %v1381, %v1382
    %v1384 = vsel %vm1009, 1, 0
    %v1385 = vadd.s32 %v1383, %v1384
    %v1386 = vsel %vm1046, 1, 0
    %v1387 = vadd.s32 %v1385, %v1386
    %v1388 = vsel %vm1083, 1, 0
    %v1389 = vadd.s32 %v1387, %v1388
    %v1390 = vsel %vm1121, 1, 0
    %v1391 = vadd.s32 %v1389, %v1390
    %v1392 = vsel %vm1158, 1, 0
    %v1393 = vadd.s32 %v1391, %v1392
    %vm1394 = vcmp.ge.s32.totalorder %v28, 72
    %v1395 = vsel %vm1394, 1, 0
    %v1396 = vadd.s32 %v1393, %v1395
    %vm1397 = vcmp.ge.s32.totalorder %v28, 80
    %v1398 = vsel %vm1397, 1, 0
    %v1399 = vadd.s32 %v1396, %v1398
    %vm1400 = vcmp.ge.s32.totalorder %v28, 88
    %v1401 = vsel %vm1400, 1, 0
    %v1402 = vadd.s32 %v1399, %v1401
    %vm1403 = vcmp.ge.s32.totalorder %v28, 96
    %v1404 = vsel %vm1403, 1, 0
    %v1405 = vadd.s32 %v1402, %v1404
    %vm1406 = vcmp.ge.s32.totalorder %v28, 104
    %v1407 = vsel %vm1406, 1, 0
    %v1408 = vadd.s32 %v1405, %v1407
    %vm1409 = vcmp.ge.s32.totalorder %v28, 112
    %v1410 = vsel %vm1409, 1, 0
    %v1411 = vadd.s32 %v1408, %v1410
    %vm1412 = vcmp.ge.s32.totalorder %v28, 120
    %v1413 = vsel %vm1412, 1, 0
    %v1414 = vadd.s32 %v1411, %v1413
    %v1415 = vlaneseq
    %v1416 = vshrl.u32 %v1415, 7
    %vm1417 = vcmp.ge.s32.totalorder %v1416, 2
    %v1418 = vsel %vm1417, 1, 0
    %vm1419 = vcmp.ge.s32.totalorder %v1416, 4
    %v1420 = vsel %vm1419, 1, 0
    %v1421 = vadd.s32 %v1418, %v1420
    %vm1422 = vcmp.ge.s32.totalorder %v1416, 6
    %v1423 = vsel %vm1422, 1, 0
    %v1424 = vadd.s32 %v1421, %v1423
    %v1425 = vadd.s32 %v1424, 4
    %v1426 = vadd.s32 %v1424, 8
    %v1427 = vadd.s32 %v1424, 12
    %vm1428 = vcmp.eq.s32.totalorder %v1414, %v1424
    %vm1429 = vcmp.eq.s32.totalorder %v1414, %v1425
    %vm1430 = vcmp.eq.s32.totalorder %v1414, %v1426
    %vm1431 = vcmp.eq.s32.totalorder %v1414, %v1427
    %v1432 = vsel %vm1428, 1, 0
    %v1433 = vsel %vm1429, 1, 0
    %v1434 = vsel %vm1430, 1, 0
    %v1435 = vsel %vm1431, 1, 0
    %vm1436 = vcmp.eq.s32.totalorder %v1432, 1
    %vm1437 = vcmp.eq.s32.totalorder %v1433, 1
    %vm1438 = vcmp.eq.s32.totalorder %v1434, 1
    %vm1439 = vcmp.eq.s32.totalorder %v1435, 1
    %v1440 = vsel %vm1436, %v1363, 0.0
    %v1441 = vsel %vm1436, %v1364, 0.0
    %v1442 = vsel %vm1437, %v1365, 0.0
    %v1443 = vsel %vm1437, %v1366, 0.0
    %v1444 = vsel %vm1438, %v1367, 0.0
    %v1445 = vsel %vm1438, %v1368, 0.0
    %v1446 = vsel %vm1439, %v1369, 0.0
    %v1447 = vsel %vm1439, %v1370, 0.0
    %v1448 = vsel %vm1436, %v1371, 0.0
    %v1449 = vsel %vm1436, %v1372, 0.0
    %v1450 = vsel %vm1437, %v1373, 0.0
    %v1451 = vsel %vm1437, %v1374, 0.0
    %v1452 = vsel %vm1438, %v1375, 0.0
    %v1453 = vsel %vm1438, %v1376, 0.0
    %v1454 = vsel %vm1439, %v1377, 0.0
    %v1455 = vsel %vm1439, %v1378, 0.0
    %v1456 = vrot.slane %v1440, 4
    %v1457 = vmax.f32 %v1440, %v1456
    %v1458 = vrot.slane %v1457, 2
    %v1459 = vmax.f32 %v1457, %v1458
    %v1460 = vrot.slane %v1459, 1
    %v1461 = vmax.f32 %v1459, %v1460
    %v1462 = vrot.slane %v1441, 4
    %v1463 = vmax.f32 %v1441, %v1462
    %v1464 = vrot.slane %v1463, 2
    %v1465 = vmax.f32 %v1463, %v1464
    %v1466 = vrot.slane %v1465, 1
    %v1467 = vmax.f32 %v1465, %v1466
    %v1468 = vrot.slane %v1442, 4
    %v1469 = vmax.f32 %v1442, %v1468
    %v1470 = vrot.slane %v1469, 2
    %v1471 = vmax.f32 %v1469, %v1470
    %v1472 = vrot.slane %v1471, 1
    %v1473 = vmax.f32 %v1471, %v1472
    %v1474 = vrot.slane %v1443, 4
    %v1475 = vmax.f32 %v1443, %v1474
    %v1476 = vrot.slane %v1475, 2
    %v1477 = vmax.f32 %v1475, %v1476
    %v1478 = vrot.slane %v1477, 1
    %v1479 = vmax.f32 %v1477, %v1478
    %v1480 = vrot.slane %v1444, 4
    %v1481 = vmax.f32 %v1444, %v1480
    %v1482 = vrot.slane %v1481, 2
    %v1483 = vmax.f32 %v1481, %v1482
    %v1484 = vrot.slane %v1483, 1
    %v1485 = vmax.f32 %v1483, %v1484
    %v1486 = vrot.slane %v1445, 4
    %v1487 = vmax.f32 %v1445, %v1486
    %v1488 = vrot.slane %v1487, 2
    %v1489 = vmax.f32 %v1487, %v1488
    %v1490 = vrot.slane %v1489, 1
    %v1491 = vmax.f32 %v1489, %v1490
    %v1492 = vrot.slane %v1446, 4
    %v1493 = vmax.f32 %v1446, %v1492
    %v1494 = vrot.slane %v1493, 2
    %v1495 = vmax.f32 %v1493, %v1494
    %v1496 = vrot.slane %v1495, 1
    %v1497 = vmax.f32 %v1495, %v1496
    %v1498 = vrot.slane %v1447, 4
    %v1499 = vmax.f32 %v1447, %v1498
    %v1500 = vrot.slane %v1499, 2
    %v1501 = vmax.f32 %v1499, %v1500
    %v1502 = vrot.slane %v1501, 1
    %v1503 = vmax.f32 %v1501, %v1502
    %v1504 = vrot.slane %v1448, 4
    %v1505 = vmax.f32 %v1448, %v1504
    %v1506 = vrot.slane %v1505, 2
    %v1507 = vmax.f32 %v1505, %v1506
    %v1508 = vrot.slane %v1507, 1
    %v1509 = vmax.f32 %v1507, %v1508
    %v1510 = vrot.slane %v1449, 4
    %v1511 = vmax.f32 %v1449, %v1510
    %v1512 = vrot.slane %v1511, 2
    %v1513 = vmax.f32 %v1511, %v1512
    %v1514 = vrot.slane %v1513, 1
    %v1515 = vmax.f32 %v1513, %v1514
    %v1516 = vrot.slane %v1450, 4
    %v1517 = vmax.f32 %v1450, %v1516
    %v1518 = vrot.slane %v1517, 2
    %v1519 = vmax.f32 %v1517, %v1518
    %v1520 = vrot.slane %v1519, 1
    %v1521 = vmax.f32 %v1519, %v1520
    %v1522 = vrot.slane %v1451, 4
    %v1523 = vmax.f32 %v1451, %v1522
    %v1524 = vrot.slane %v1523, 2
    %v1525 = vmax.f32 %v1523, %v1524
    %v1526 = vrot.slane %v1525, 1
    %v1527 = vmax.f32 %v1525, %v1526
    %v1528 = vrot.slane %v1452, 4
    %v1529 = vmax.f32 %v1452, %v1528
    %v1530 = vrot.slane %v1529, 2
    %v1531 = vmax.f32 %v1529, %v1530
    %v1532 = vrot.slane %v1531, 1
    %v1533 = vmax.f32 %v1531, %v1532
    %v1534 = vrot.slane %v1453, 4
    %v1535 = vmax.f32 %v1453, %v1534
    %v1536 = vrot.slane %v1535, 2
    %v1537 = vmax.f32 %v1535, %v1536
    %v1538 = vrot.slane %v1537, 1
    %v1539 = vmax.f32 %v1537, %v1538
    %v1540 = vrot.slane %v1454, 4
    %v1541 = vmax.f32 %v1454, %v1540
    %v1542 = vrot.slane %v1541, 2
    %v1543 = vmax.f32 %v1541, %v1542
    %v1544 = vrot.slane %v1543, 1
    %v1545 = vmax.f32 %v1543, %v1544
    %v1546 = vrot.slane %v1455, 4
    %v1547 = vmax.f32 %v1455, %v1546
    %v1548 = vrot.slane %v1547, 2
    %v1549 = vmax.f32 %v1547, %v1548
    %v1550 = vrot.slane %v1549, 1
    %v1551 = vmax.f32 %v1549, %v1550
    %v1552 = vmax.f32 %v1461, %v1473
    %v1553 = vmax.f32 %v1467, %v1479
    %v1554 = vmax.f32 %v1552, %v1485
    %v1555 = vmax.f32 %v1553, %v1491
    %v1556 = vmax.f32 %v1554, %v1497
    %v1557 = vmax.f32 %v1555, %v1503
    %v1558 = vmax.f32 %v1556, %v1557
    %v1559 = vmax.f32 %v1509, %v1521
    %v1560 = vmax.f32 %v1515, %v1527
    %v1561 = vmax.f32 %v1559, %v1533
    %v1562 = vmax.f32 %v1560, %v1539
    %v1563 = vmax.f32 %v1561, %v1545
    %v1564 = vmax.f32 %v1562, %v1551
    %v1565 = vmax.f32 %v1563, %v1564
    %v1566 = vld [vmem:[%s5] sm:$0xff]
    %v1567 = vld [vmem:[%s5 + $0x8] sm:$0xff]
    %v1568 = vld [vmem:[%s5 + $0x10] sm:$0xff]
    %v1569 = vld [vmem:[%s5 + $0x18] sm:$0xff]
    %v1570 = vld [vmem:[%s5 + $0x20] sm:$0xff]
    %v1571 = vld [vmem:[%s5 + $0x28] sm:$0xff]
    %v1572 = vld [vmem:[%s5 + $0x30] sm:$0xff]
    %v1573 = vld [vmem:[%s5 + $0x38] sm:$0xff]
    %v1574 = vld [vmem:[%s5 + $0x40] sm:$0xff]
    %v1575 = vld [vmem:[%s5 + $0x48] sm:$0xff]
    %v1576 = vld [vmem:[%s5 + $0x50] sm:$0xff]
    %v1577 = vld [vmem:[%s5 + $0x58] sm:$0xff]
    %v1578 = vld [vmem:[%s5 + $0x60] sm:$0xff]
    %v1579 = vld [vmem:[%s5 + $0x68] sm:$0xff]
    %v1580 = vld [vmem:[%s5 + $0x70] sm:$0xff]
    %v1581 = vld [vmem:[%s5 + $0x78] sm:$0xff]
    %v1582 = vld [vmem:[%s6] sm:$0x1]
    %v1584 = vlaneseq
    %v1585 = vshrl.u32 %v1584, 7
    %v1586 = vsub.s32 0, %v1585
    %v1587 = vrot.slane %v1582, %v1586
    %vm1591 = vcmask 1041409
    %v1592 = vsel %vm1591, %v1565, %v1558
    %1594 = vmatprep.subr.mxu0 0.0
    %1595 = vmatpush1.msra.mxu0 %v1566
    %1596 = vmatprep.subr.mxu0 0.0
    %1597 = vmatpush1.msra.mxu0 %v1567
    %1598 = vmatprep.subr.mxu0 0.0
    %1599 = vmatpush1.msra.mxu0 %v1568
    %1600 = vmatprep.subr.mxu0 0.0
    %1601 = vmatpush1.msra.mxu0 %v1569
    %1602 = vmatprep.subr.mxu0 0.0
    %1603 = vmatpush1.msra.mxu0 %v1570
    %1604 = vmatprep.subr.mxu0 0.0
    %1605 = vmatpush1.msra.mxu0 %v1571
    %1606 = vmatprep.subr.mxu0 0.0
    %1607 = vmatpush1.msra.mxu0 %v1572
    %1608 = vmatprep.subr.mxu0 0.0
    %1609 = vmatpush1.msra.mxu0 %v1573
    %1610 = vmatprep.subr.mxu0 0.0
    %1611 = vmatpush1.msra.mxu0 %v1574
    %1612 = vmatprep.subr.mxu0 0.0
    %1613 = vmatpush1.msra.mxu0 %v1575
    %1614 = vmatprep.subr.mxu0 0.0
    %1615 = vmatpush1.msra.mxu0 %v1576
    %1616 = vmatprep.subr.mxu0 0.0
    %1617 = vmatpush1.msra.mxu0 %v1577
    %1618 = vmatprep.subr.mxu0 0.0
    %1619 = vmatpush1.msra.mxu0 %v1578
    %1620 = vmatprep.subr.mxu0 0.0
    %1621 = vmatpush1.msra.mxu0 %v1579
    %1622 = vmatprep.subr.mxu0 0.0
    %1623 = vmatpush1.msra.mxu0 %v1580
    %1624 = vmatprep.subr.mxu0 0.0
    %1625 = vmatpush1.msra.mxu0 %v1581
    %1626 = vmatprep.subr.mxu0 0.0
    %1627 = vmatpush1.msra.mxu0 0.0
    %1628 = vmatprep.subr.mxu0 0.0
    %1629 = vmatpush1.msra.mxu0 0.0
    %1630 = vmatprep.subr.mxu0 0.0
    %1631 = vmatpush1.msra.mxu0 0.0
    %1632 = vmatprep.subr.mxu0 0.0
    %1633 = vmatpush1.msra.mxu0 0.0
    %1634 = vmatprep.subr.mxu0 0.0
    %1635 = vmatpush1.msra.mxu0 0.0
    %1636 = vmatprep.subr.mxu0 0.0
    %1637 = vmatpush1.msra.mxu0 0.0
    %1638 = vmatprep.subr.mxu0 0.0
    %1639 = vmatpush1.msra.mxu0 0.0
    %1640 = vmatprep.subr.mxu0 0.0
    %1641 = vmatpush1.msra.mxu0 0.0
    %1642 = vmatprep.subr.mxu0 0.0
    %1643 = vmatpush1.msra.mxu0 0.0
    %1644 = vmatprep.subr.mxu0 0.0
    %1645 = vmatpush1.msra.mxu0 0.0
    %1646 = vmatprep.subr.mxu0 0.0
    %1647 = vmatpush1.msra.mxu0 0.0
    %1648 = vmatprep.subr.mxu0 0.0
    %1649 = vmatpush1.msra.mxu0 0.0
    %1650 = vmatprep.subr.mxu0 0.0
    %1651 = vmatpush1.msra.mxu0 0.0
    %1652 = vmatprep.subr.mxu0 0.0
    %1653 = vmatpush1.msra.mxu0 0.0
    %1654 = vmatprep.subr.mxu0 0.0
    %1655 = vmatpush1.msra.mxu0 0.0
    %1656 = vmatprep.subr.mxu0 0.0
    %1657 = vmatpush1.msra.mxu0 0.0
    %1658 = vmatprep.mubr.f32.mxu0 0.0
    %1659 = vmatmul.mubr.f32.gmra.mrb[0].mxu0 %v1592
    %v1660 = vpop.f32.mrb[0].mxu0
    %v1661 = vadd.f32 %v1587, %v1660
    %v1662 = vpop.f32.mrb[0].mxu0
    %1663 = vdwg.mxu0
    %1664 = vst [vmem:[#allocation4] sm:$0x3] %v1661
    // Predicated region
    $region30: #{baseline_train_forward.1} parent=1 // pred_check
      _
    $region31: #{baseline_train_forward.1} parent=1 // pred_check_branch
      %1666 = sbr.rel (0) target = $region33
    $region32: #{baseline_train_forward.1} parent=1 // pred_region
      %s1668 = ssub.s32 32, 32
      %1669 = vsyncadd [#allocation5], %s1668
      %s1671 = sshll.u32 [#allocation4], 4
      %s1672 = int_to_ptr.vmem [resolvable:$true] %s1671
      %1674 = dma.vmem_to_hbm [thread:$0]  %s1672, 32, %s7, [#allocation5]
    $region33: #{baseline_train_forward.1} parent=1 // pred_fallthru
      _
    // Predicated region
    $region34: #{baseline_train_forward.1} parent=1 // pred_check
      _
    $region35: #{baseline_train_forward.1} parent=1 // pred_check_branch
      %1676 = sbr.rel (0) target = $region37
    $region36: #{baseline_train_forward.1} parent=1 // pred_region
      %1677 = dma.done [#allocation5], 32
    $region37: #{baseline_train_forward.1} parent=1 // pred_fallthru
      _
    %1678 = vsyncpa [#allocation5], 1

</llo_original>
